<compile_context>
chip_gen: v5e
topology: v5e:2x2
jax: 0.10.0
libtpu: 0.0.40
codegen_flags: <defaults>
</compile_context>

<pallas_src>
import numpy as np
import jax
import jax.numpy as jnp
from jax.experimental import pallas as pl
from jax.experimental.pallas import tpu as pltpu

# ----------------------------- config (small) --------------------------------
PAD = 0                      # Constants.PAD
MAX_SEQ_LEN = 16             # config['max_seq_len']
N_VOCAB = 360 + 1
D_MODEL = 32                 # encoder_hidden
N_LAYERS = 2                 # encoder_layer
N_HEAD = 2                   # encoder_head
D_K = D_MODEL // N_HEAD
D_V = D_MODEL // N_HEAD
D_INNER = 64                 # conv_filter_size
K1, K2 = 3, 1                # conv_kernel_size
NEG_INF = -1e30
LANES = 128

# Row layout of the packed parameter slab (per layer). Matrices are padded to
# 128 lanes AND their contraction dims are padded to 128 rows so activations
# can stay at full 128-lane width through every matmul.
R_WQKV = 0                                   # (128, 128): rows 0:32 = [Wq*s|Wk|Wv]
N_WQKV = LANES
R_WO = R_WQKV + N_WQKV                       # (32, 128): rows = d_model
N_WO = D_MODEL
R_W1 = R_WO + N_WO                           # 3 taps x (128,128): rows 0:32 valid
N_W1 = K1 * LANES
R_W2 = R_W1 + N_W1                           # (128, 128): rows 0:64 valid
N_W2 = LANES
R_VEC = R_W2 + N_W2                          # 8 vector rows
N_VEC = 8
R_TOTAL = R_VEC + N_VEC                      # 680 (multiple of 8)
assert R_TOTAL % 8 == 0
assert 3 * D_MODEL <= LANES and D_INNER <= LANES


# ------------------------- sinusoid position table ---------------------------
def get_sinusoid_encoding_table(n_position, d_hid):
    pos = np.arange(n_position, dtype=np.float64)[:, None]
    hid = np.arange(d_hid, dtype=np.float64)[None, :]
    angle = pos / np.power(10000.0, 2.0 * (np.floor(hid / 2.0)) / d_hid)
    table = angle.copy()
    table[:, 0::2] = np.sin(table[:, 0::2])
    table[:, 1::2] = np.cos(table[:, 1::2])
    return jnp.asarray(table, dtype=jnp.float32)


def _layer_norm(x, g, b):
    mu = jnp.mean(x, axis=-1, keepdims=True)
    var = jnp.mean(jnp.square(x - mu), axis=-1, keepdims=True)
    return (x - mu) * jax.lax.rsqrt(var + 1e-5) * g + b


# ----------------------------- parameter packing ------------------------------
def pack_params(layers):
    """Pack all per-layer params into one (N_LAYERS, R_TOTAL, 128) f32 slab."""
    inv_temp = 1.0 / float(np.sqrt(D_K))

    def pad_block(a, rows):
        return jnp.pad(a, ((0, rows - a.shape[0]), (0, LANES - a.shape[1])))

    def pad_vec(v):
        return jnp.pad(v, (0, LANES - v.shape[0]))[None, :]

    slabs = []
    for lp in layers:
        # fold the 1/sqrt(d_k) score scale into Wq / bq
        wqkv = jnp.concatenate([lp['wq'] * inv_temp, lp['wk'], lp['wv']], axis=1)  # (D, 3D)
        bqkv = jnp.concatenate([lp['bq'] * inv_temp, lp['bk'], lp['bv']], axis=0)  # (3D,)
        rows = [pad_block(wqkv, N_WQKV),              # (128,128)
                pad_block(lp['wo'], N_WO)]            # (32,128)
        for t in range(K1):
            rows.append(pad_block(lp['w1'][t], LANES))   # (32,64) -> (128,128)
        rows.append(pad_block(lp['w2'][0], N_W2))        # (64,32) -> (128,128)
        rows += [pad_vec(bqkv), pad_vec(lp['bo']), pad_vec(lp['b1']), pad_vec(lp['b2']),
                 pad_vec(lp['ln1_g']), pad_vec(lp['ln1_b']),
                 pad_vec(lp['ln2_g']), pad_vec(lp['ln2_b'])]
        slab = jnp.concatenate(rows, axis=0)
        assert slab.shape == (R_TOTAL, LANES)
        slabs.append(slab)
    return jnp.stack(slabs, axis=0)


# ------------------------------ Pallas kernel ---------------------------------
def make_encoder_kernel(n_layers, n_head, B, L):
    D, DI = D_MODEL, D_INNER
    d_k = D // n_head
    d_v = d_k
    BL = B * L
    inv_d = 1.0 / float(D)

    def layer_norm_masked(x, g, b, lane_valid):
        # x is (BL,128) with lanes >= D zero; reduce with explicit 1/D divisor.
        mu = jnp.sum(x, axis=-1, keepdims=True) * inv_d
        centered = (x - mu) * lane_valid
        var = jnp.sum(centered * centered, axis=-1, keepdims=True) * inv_d
        return centered * jax.lax.rsqrt(var + 1e-5) * g + b

    def kernel(x_ref, m_ref, p_ref, out_ref):
        x = x_ref[...]                                        # (BL, 128)
        bias = m_ref[:, 0:BL]                                 # (BL, BL) additive attn bias
        keep = jnp.broadcast_to(m_ref[:, BL:BL + 1], (BL, LANES))   # masked_fill rows

        # constant masks (built once, reused by both layers)
        row_id = jax.lax.broadcasted_iota(jnp.int32, (BL, LANES), 0)
        lane_id = jax.lax.broadcasted_iota(jnp.int32, (BL, LANES), 1)
        lane_valid = (lane_id < D).astype(jnp.float32)
        not_first = (row_id % L != 0).astype(jnp.float32)       # conv tap boundary
        not_last = (row_id % L != L - 1).astype(jnp.float32)

        for li in range(n_layers):
            # full-width, sublane-aligned weight reads (no narrow slices)
            Wqkv = p_ref[li, R_WQKV:R_WQKV + N_WQKV, :]          # (128,128)
            Wo = p_ref[li, R_WO:R_WO + N_WO, :]                  # (32,128)
            W1t = [p_ref[li, R_W1 + t * LANES:R_W1 + (t + 1) * LANES, :]
                   for t in range(K1)]                           # 3 x (128,128)
            W2 = p_ref[li, R_W2:R_W2 + N_W2, :]                  # (128,128)
            vecs = p_ref[li, R_VEC:R_VEC + N_VEC, :]             # ONE (8,128) tile
            bqkv, bo, b1, b2 = vecs[0:1], vecs[1:2], vecs[2:3], vecs[3:4]
            g1, be1, g2, be2 = vecs[4:5], vecs[5:6], vecs[6:7], vecs[7:8]

            # ---- multi-head self-attention on lane slices (no restacking) ----
            residual = x
            qkv = jnp.dot(x, Wqkv, preferred_element_type=jnp.float32) + bqkv  # (BL,128)
            attn_out = jnp.broadcast_to(bo, (BL, LANES))
            for h in range(n_head):
                q = qkv[:, h * d_k:(h + 1) * d_k]                       # (BL, d_k)
                k = qkv[:, D + h * d_k:D + (h + 1) * d_k]
                v = qkv[:, 2 * D + h * d_k:2 * D + (h + 1) * d_k]
                s = jax.lax.dot_general(q, k, (((1,), (1,)), ((), ())),
                                        preferred_element_type=jnp.float32)
                s = s + bias                                            # (BL, BL)
                m = jnp.max(s, axis=-1, keepdims=True)
                e = jnp.exp(s - m)
                p_attn = e * pl.reciprocal(jnp.sum(e, axis=-1, keepdims=True),
                                           approx=True)
                ctx = jnp.dot(p_attn, v, preferred_element_type=jnp.float32)
                attn_out = attn_out + jnp.dot(ctx, Wo[h * d_v:(h + 1) * d_v, :],
                                              preferred_element_type=jnp.float32)
            x1 = layer_norm_masked(attn_out + residual, g1, be1, lane_valid) * keep

            # ---- position-wise conv FFN: rolled taps -> relu -> matmul ----
            x_prev = pltpu.roll(x1, 1, axis=0) * not_first      # row i <- x1[i-1]
            x_next = pltpu.roll(x1, BL - 1, axis=0) * not_last  # row i <- x1[i+1]
            h1 = (jnp.dot(x_prev, W1t[0], preferred_element_type=jnp.float32)
                  + jnp.dot(x1, W1t[1], preferred_element_type=jnp.float32)
                  + jnp.dot(x_next, W1t[2], preferred_element_type=jnp.float32)
                  + b1)
            h1 = jnp.maximum(h1, 0.0)
            h2 = jnp.dot(h1, W2, preferred_element_type=jnp.float32) + b2
            x = layer_norm_masked(h2 + x1, g2, be2, lane_valid) * keep

        out_ref[...] = x

    return kernel


# ------------------------------ encoder wrapper -------------------------------
def encoder_forward(src_seq, mask, params, pos_enc):
    B, L = src_seq.shape
    BL = B * L
    assert BL % 8 == 0 and BL < LANES

    # glue: embedding lookup + positional encoding (plain JAX), lane-dense pack
    x = params['emb'][src_seq] + pos_enc[None, :L, :]                  # (B, L, D)
    x_flat = x.reshape(BL, D_MODEL)
    x_in = jnp.pad(x_flat, ((0, 0), (0, LANES - D_MODEL)))             # (BL, 128)

    # one aligned mask tile: lanes 0:BL = combined additive attention bias
    # (batch-block-diagonal + key padding), lane BL = keep (masked_fill) flag.
    mask_f = mask.astype(jnp.float32).reshape(BL)                      # 1.0 = padded
    keep_vec = 1.0 - mask_f
    batch_id = jnp.arange(BL, dtype=jnp.int32) // L
    same_batch = batch_id[:, None] == batch_id[None, :]
    valid_key = keep_vec[None, :] > 0.5
    bias = jnp.where(same_batch & valid_key, 0.0, NEG_INF)             # (BL, BL)
    mtile = jnp.concatenate(
        [bias, keep_vec[:, None], jnp.zeros((BL, LANES - BL - 1), jnp.float32)],
        axis=1)                                                        # (BL, 128)

    pslab = pack_params(params['layers'])                              # (NL, 680, 128)

    kernel = make_encoder_kernel(N_LAYERS, N_HEAD, B, L)
    out = pl.pallas_call(
        kernel,
        grid=(1,),                                                     # single fused step
        in_specs=[
            pl.BlockSpec((BL, LANES), lambda i: (0, 0)),               # activations
            pl.BlockSpec((BL, LANES), lambda i: (0, 0)),               # mask tile
            pl.BlockSpec((N_LAYERS, R_TOTAL, LANES), lambda i: (0, 0, 0)),  # params
        ],
        out_specs=pl.BlockSpec((BL, LANES), lambda i: (0, 0)),
        out_shape=jax.ShapeDtypeStruct((BL, LANES), jnp.float32),
        compiler_params=pltpu.CompilerParams(dimension_semantics=("arbitrary",)),
    )(x_in, mtile, pslab)

    return out[:, :D_MODEL].reshape(B, L, D_MODEL)


# -------------------------- pure-JAX reference ---------------------------------
def _conv1d_ref(x, w, b, ksize):
    pad = (ksize - 1) // 2
    B, L, _ = x.shape
    xp = jnp.pad(x, ((0, 0), (pad, pad), (0, 0)))
    out = jnp.zeros((B, L, w.shape[-1]), jnp.float32) + b
    for t in range(ksize):
        out = out + jnp.einsum('blc,cd->bld', xp[:, t:t + L, :], w[t])
    return out


def encoder_reference(src_seq, mask, params, pos_enc):
    B, L = src_seq.shape
    x = params['emb'][src_seq] + pos_enc[None, :L, :]
    mask_f = mask.astype(jnp.float32)
    for lp in params['layers']:
        residual = x
        q = (x @ lp['wq'] + lp['bq']).reshape(B, L, N_HEAD, D_K).transpose(0, 2, 1, 3)
        k = (x @ lp['wk'] + lp['bk']).reshape(B, L, N_HEAD, D_K).transpose(0, 2, 1, 3)
        v = (x @ lp['wv'] + lp['bv']).reshape(B, L, N_HEAD, D_V).transpose(0, 2, 1, 3)
        scores = jnp.einsum('bhqd,bhkd->bhqk', q, k) / np.sqrt(D_K)
        scores = jnp.where(mask_f[:, None, None, :] > 0, NEG_INF, scores)
        attn = jax.nn.softmax(scores, axis=-1)
        o = jnp.einsum('bhqk,bhkd->bhqd', attn, v)
        o = o.transpose(0, 2, 1, 3).reshape(B, L, N_HEAD * D_V)
        o = o @ lp['wo'] + lp['bo']
        x1 = _layer_norm(o + residual, lp['ln1_g'], lp['ln1_b'])
        x1 = jnp.where(mask_f[:, :, None] > 0, 0.0, x1)
        res2 = x1
        h1 = jax.nn.relu(_conv1d_ref(x1, lp['w1'], lp['b1'], K1))
        h2 = _conv1d_ref(h1, lp['w2'], lp['b2'], K2)
        x2 = _layer_norm(h2 + res2, lp['ln2_g'], lp['ln2_b'])
        x = jnp.where(mask_f[:, :, None] > 0, 0.0, x2)
    return x


# ------------------------------- param init -----------------------------------
def init_params(key):
    keys = jax.random.split(key, 1 + N_LAYERS)
    emb = 0.1 * jax.random.normal(keys[0], (N_VOCAB, D_MODEL), jnp.float32)
    emb = emb.at[PAD].set(0.0)                      # padding_idx=0 row is zeros
    layers = []
    for li in range(N_LAYERS):
        ks = jax.random.split(keys[1 + li], 6)

        def lin(k, fan_in, fan_out):
            return (1.0 / np.sqrt(fan_in)) * jax.random.normal(
                k, (fan_in, fan_out), jnp.float32)

        lp = dict(
            wq=lin(ks[0], D_MODEL, N_HEAD * D_K), bq=jnp.zeros((N_HEAD * D_K,), jnp.float32),
            wk=lin(ks[1], D_MODEL, N_HEAD * D_K), bk=jnp.zeros((N_HEAD * D_K,), jnp.float32),
            wv=lin(ks[2], D_MODEL, N_HEAD * D_V), bv=jnp.zeros((N_HEAD * D_V,), jnp.float32),
            wo=lin(ks[3], N_HEAD * D_V, D_MODEL), bo=jnp.zeros((D_MODEL,), jnp.float32),
            ln1_g=jnp.ones((D_MODEL,), jnp.float32), ln1_b=jnp.zeros((D_MODEL,), jnp.float32),
            w1=0.1 * jax.random.normal(ks[4], (K1, D_MODEL, D_INNER), jnp.float32),
            b1=jnp.zeros((D_INNER,), jnp.float32),
            w2=0.1 * jax.random.normal(ks[5], (K2, D_INNER, D_MODEL), jnp.float32),
            b2=jnp.zeros((D_MODEL,), jnp.float32),
            ln2_g=jnp.ones((D_MODEL,), jnp.float32), ln2_b=jnp.zeros((D_MODEL,), jnp.float32),
        )
        layers.append(lp)
    return dict(emb=emb, layers=layers)


# ---------------------------------- main ---------------------------------------
if __name__ == "__main__":
    key = jax.random.PRNGKey(0)
    k_param, k_seq = jax.random.split(key)

    B, L = 2, 8
    params = init_params(k_param)
    pos_enc = get_sinusoid_encoding_table(MAX_SEQ_LEN + 1, D_MODEL)   # (17, 32)

    src_seq = jax.random.randint(k_seq, (B, L), 1, N_VOCAB, dtype=jnp.int32)
    src_seq = src_seq.at[1, 6:].set(PAD)            # padded tail in second example
    mask = (src_seq == PAD)                         # (B, L) bool, True = padded

    run = jax.jit(encoder_forward)
    out = run(src_seq, mask, params, pos_enc)
    out = jax.block_until_ready(out)

    ref = encoder_reference(src_seq, mask, params, pos_enc)
    ref = jax.block_until_ready(ref)

    assert out.shape == (B, L, D_MODEL)
    assert bool(jnp.all(jnp.isfinite(out)))
    np.testing.assert_allclose(np.asarray(out), np.asarray(ref), rtol=1e-2, atol=1e-2)

    print("KERNEL_OK")
</pallas_src>

<mosaic_0001>
module attributes {stable_mosaic.version = 11 : i64} {
  func.func @kernel(%arg0: i32, %arg1: memref<16x128xf32, #tpu.memory_space<vmem>>, %arg2: memref<16x128xf32, #tpu.memory_space<vmem>>, %arg3: memref<2x680x128xf32, #tpu.memory_space<vmem>>, %arg4: memref<16x128xf32, #tpu.memory_space<vmem>>) attributes {dimension_semantics = [#tpu.dimension_semantics<arbitrary>], iteration_bounds = array<i64: 1>, scalar_prefetch = 0 : i64, scratch_operands = 0 : i64, tpu.core_type = #tpu.core_type<tc>, window_params = [{pipeline_mode = #tpu.pipeline_mode<synchronous>, transform_indices = @transform_0, window_bounds = array<i64: 16, 128>}, {pipeline_mode = #tpu.pipeline_mode<synchronous>, transform_indices = @transform_1, window_bounds = array<i64: 16, 128>}, {pipeline_mode = #tpu.pipeline_mode<synchronous>, transform_indices = @transform_2, window_bounds = array<i64: 2, 680, 128>}, {pipeline_mode = #tpu.pipeline_mode<synchronous>, transform_indices = @transform_3, window_bounds = array<i64: 16, 128>}]} {
    %c0 = arith.constant 0 : index
    %c0_0 = arith.constant 0 : index
    %0 = vector.load %arg1[%c0, %c0_0] : memref<16x128xf32, #tpu.memory_space<vmem>>, vector<16x128xf32>
    %c0_1 = arith.constant 0 : index
    %c0_2 = arith.constant 0 : index
    %1 = vector.load %arg2[%c0_1, %c0_2] : memref<16x128xf32, #tpu.memory_space<vmem>>, vector<16x16xf32>
    %c0_3 = arith.constant 0 : index
    %c16 = arith.constant 16 : index
    %2 = vector.load %arg2[%c0_3, %c16] : memref<16x128xf32, #tpu.memory_space<vmem>>, vector<16x1xf32>
    %3 = vector.shape_cast %2 : vector<16x1xf32> to vector<16x1xf32>
    %4 = vector.broadcast %3 : vector<16x1xf32> to vector<16x128xf32>
    %5 = tpu.iota {dimensions = array<i32: 0>} : vector<16x128xi32>
    %6 = tpu.iota {dimensions = array<i32: 1>} : vector<16x128xi32>
    %c32_i32 = arith.constant 32 : i32
    %7 = vector.broadcast %c32_i32 : i32 to vector<16x128xi32>
    %8 = arith.cmpi slt, %6, %7 : vector<16x128xi32>
    %9 = arith.extui %8 : vector<16x128xi1> to vector<16x128xi32>
    %10 = arith.sitofp %9 : vector<16x128xi32> to vector<16x128xf32>
    %c8_i32 = arith.constant 8 : i32
    %c0_i32 = arith.constant 0 : i32
    %11 = arith.cmpi eq, %c8_i32, %c0_i32 : i32
    %c1_i32 = arith.constant 1 : i32
    %12 = arith.select %11, %c1_i32, %c8_i32 : i32
    %13 = vector.broadcast %12 : i32 to vector<16x128xi32>
    %14 = arith.remsi %5, %13 : vector<16x128xi32>
    %c0_i32_4 = arith.constant 0 : i32
    %15 = vector.broadcast %c0_i32_4 : i32 to vector<16x128xi32>
    %16 = arith.cmpi ne, %14, %15 : vector<16x128xi32>
    %c0_i32_5 = arith.constant 0 : i32
    %17 = vector.broadcast %c0_i32_5 : i32 to vector<16x128xi32>
    %18 = arith.cmpi slt, %14, %17 : vector<16x128xi32>
    %c0_i32_6 = arith.constant 0 : i32
    %19 = arith.cmpi slt, %12, %c0_i32_6 : i32
    %20 = vector.broadcast %19 : i1 to vector<16x128xi1>
    %21 = vector.broadcast %20 : vector<16x128xi1> to vector<16x128xi1>
    %22 = arith.xori %18, %21 : vector<16x128xi1>
    %23 = arith.andi %22, %16 : vector<16x128xi1>
    %24 = vector.broadcast %12 : i32 to vector<16x128xi32>
    %25 = arith.addi %14, %24 : vector<16x128xi32>
    %26 = arith.select %23, %25, %14 : vector<16x128xi1>, vector<16x128xi32>
    %c0_i32_7 = arith.constant 0 : i32
    %27 = vector.broadcast %c0_i32_7 : i32 to vector<16x128xi32>
    %28 = arith.cmpi ne, %26, %27 : vector<16x128xi32>
    %29 = arith.extui %28 : vector<16x128xi1> to vector<16x128xi32>
    %30 = arith.sitofp %29 : vector<16x128xi32> to vector<16x128xf32>
    %c8_i32_8 = arith.constant 8 : i32
    %c0_i32_9 = arith.constant 0 : i32
    %31 = arith.cmpi eq, %c8_i32_8, %c0_i32_9 : i32
    %c1_i32_10 = arith.constant 1 : i32
    %32 = arith.select %31, %c1_i32_10, %c8_i32_8 : i32
    %33 = vector.broadcast %32 : i32 to vector<16x128xi32>
    %34 = arith.remsi %5, %33 : vector<16x128xi32>
    %c0_i32_11 = arith.constant 0 : i32
    %35 = vector.broadcast %c0_i32_11 : i32 to vector<16x128xi32>
    %36 = arith.cmpi ne, %34, %35 : vector<16x128xi32>
    %c0_i32_12 = arith.constant 0 : i32
    %37 = vector.broadcast %c0_i32_12 : i32 to vector<16x128xi32>
    %38 = arith.cmpi slt, %34, %37 : vector<16x128xi32>
    %c0_i32_13 = arith.constant 0 : i32
    %39 = arith.cmpi slt, %32, %c0_i32_13 : i32
    %40 = vector.broadcast %39 : i1 to vector<16x128xi1>
    %41 = vector.broadcast %40 : vector<16x128xi1> to vector<16x128xi1>
    %42 = arith.xori %38, %41 : vector<16x128xi1>
    %43 = arith.andi %42, %36 : vector<16x128xi1>
    %44 = vector.broadcast %32 : i32 to vector<16x128xi32>
    %45 = arith.addi %34, %44 : vector<16x128xi32>
    %46 = arith.select %43, %45, %34 : vector<16x128xi1>, vector<16x128xi32>
    %c7_i32 = arith.constant 7 : i32
    %47 = vector.broadcast %c7_i32 : i32 to vector<16x128xi32>
    %48 = arith.cmpi ne, %46, %47 : vector<16x128xi32>
    %49 = arith.extui %48 : vector<16x128xi1> to vector<16x128xi32>
    %50 = arith.sitofp %49 : vector<16x128xi32> to vector<16x128xf32>
    %c0_14 = arith.constant 0 : index
    %c0_15 = arith.constant 0 : index
    %c0_16 = arith.constant 0 : index
    %51 = vector.load %arg3[%c0_14, %c0_15, %c0_16] : memref<2x680x128xf32, #tpu.memory_space<vmem>>, vector<1x128x128xf32>
    %52 = vector.shape_cast %51 : vector<1x128x128xf32> to vector<128x128xf32>
    %c0_17 = arith.constant 0 : index
    %c128 = arith.constant 128 : index
    %c0_18 = arith.constant 0 : index
    %53 = vector.load %arg3[%c0_17, %c128, %c0_18] : memref<2x680x128xf32, #tpu.memory_space<vmem>>, vector<1x32x128xf32>
    %54 = vector.shape_cast %53 : vector<1x32x128xf32> to vector<32x128xf32>
    %c0_19 = arith.constant 0 : index
    %c160 = arith.constant 160 : index
    %c0_20 = arith.constant 0 : index
    %55 = vector.load %arg3[%c0_19, %c160, %c0_20] : memref<2x680x128xf32, #tpu.memory_space<vmem>>, vector<1x128x128xf32>
    %56 = vector.shape_cast %55 : vector<1x128x128xf32> to vector<128x128xf32>
    %c0_21 = arith.constant 0 : index
    %c288 = arith.constant 288 : index
    %c0_22 = arith.constant 0 : index
    %57 = vector.load %arg3[%c0_21, %c288, %c0_22] : memref<2x680x128xf32, #tpu.memory_space<vmem>>, vector<1x128x128xf32>
    %58 = vector.shape_cast %57 : vector<1x128x128xf32> to vector<128x128xf32>
    %c0_23 = arith.constant 0 : index
    %c416 = arith.constant 416 : index
    %c0_24 = arith.constant 0 : index
    %59 = vector.load %arg3[%c0_23, %c416, %c0_24] : memref<2x680x128xf32, #tpu.memory_space<vmem>>, vector<1x128x128xf32>
    %60 = vector.shape_cast %59 : vector<1x128x128xf32> to vector<128x128xf32>
    %c0_25 = arith.constant 0 : index
    %c544 = arith.constant 544 : index
    %c0_26 = arith.constant 0 : index
    %61 = vector.load %arg3[%c0_25, %c544, %c0_26] : memref<2x680x128xf32, #tpu.memory_space<vmem>>, vector<1x128x128xf32>
    %62 = vector.shape_cast %61 : vector<1x128x128xf32> to vector<128x128xf32>
    %c0_27 = arith.constant 0 : index
    %c672 = arith.constant 672 : index
    %c0_28 = arith.constant 0 : index
    %63 = vector.load %arg3[%c0_27, %c672, %c0_28] : memref<2x680x128xf32, #tpu.memory_space<vmem>>, vector<1x8x128xf32>
    %64 = vector.shape_cast %63 : vector<1x8x128xf32> to vector<8x128xf32>
    %65 = vector.extract_strided_slice %64 {offsets = [0, 0], sizes = [1, 128], strides = [1, 1]} : vector<8x128xf32> to vector<1x128xf32>
    %66 = vector.extract_strided_slice %64 {offsets = [1, 0], sizes = [1, 128], strides = [1, 1]} : vector<8x128xf32> to vector<1x128xf32>
    %67 = vector.extract_strided_slice %64 {offsets = [2, 0], sizes = [1, 128], strides = [1, 1]} : vector<8x128xf32> to vector<1x128xf32>
    %68 = vector.extract_strided_slice %64 {offsets = [3, 0], sizes = [1, 128], strides = [1, 1]} : vector<8x128xf32> to vector<1x128xf32>
    %69 = vector.extract_strided_slice %64 {offsets = [4, 0], sizes = [1, 128], strides = [1, 1]} : vector<8x128xf32> to vector<1x128xf32>
    %70 = vector.extract_strided_slice %64 {offsets = [5, 0], sizes = [1, 128], strides = [1, 1]} : vector<8x128xf32> to vector<1x128xf32>
    %71 = vector.extract_strided_slice %64 {offsets = [6, 0], sizes = [1, 128], strides = [1, 1]} : vector<8x128xf32> to vector<1x128xf32>
    %72 = vector.extract_strided_slice %64 {offsets = [7, 0], sizes = [1, 128], strides = [1, 1]} : vector<8x128xf32> to vector<1x128xf32>
    %cst = arith.constant dense<0.000000e+00> : vector<16x128xf32>
    %73 = tpu.matmul %0, %52, %cst {dimension_numbers = #tpu.dot_dimension_numbers<[1], [0], [0], [1], [0, 0, 1, 1], [], []>} : vector<16x128xf32>, vector<128x128xf32>, vector<16x128xf32> -> vector<16x128xf32>
    %74 = vector.broadcast %65 : vector<1x128xf32> to vector<16x128xf32>
    %75 = arith.addf %73, %74 : vector<16x128xf32>
    %76 = vector.shape_cast %66 : vector<1x128xf32> to vector<1x128xf32>
    %77 = vector.broadcast %76 : vector<1x128xf32> to vector<16x128xf32>
    %78 = vector.extract_strided_slice %75 {offsets = [0, 0], sizes = [16, 16], strides = [1, 1]} : vector<16x128xf32> to vector<16x16xf32>
    %79 = vector.extract_strided_slice %75 {offsets = [0, 32], sizes = [16, 16], strides = [1, 1]} : vector<16x128xf32> to vector<16x16xf32>
    %80 = vector.extract_strided_slice %75 {offsets = [0, 64], sizes = [16, 16], strides = [1, 1]} : vector<16x128xf32> to vector<16x16xf32>
    %cst_29 = arith.constant dense<0.000000e+00> : vector<16x16xf32>
    %81 = tpu.matmul %78, %79, %cst_29 {dimension_numbers = #tpu.dot_dimension_numbers<[1], [1], [0], [0], [0, 0, 1, 0], [], []>} : vector<16x16xf32>, vector<16x16xf32>, vector<16x16xf32> -> vector<16x16xf32>
    %82 = arith.addf %81, %1 : vector<16x16xf32>
    %cst_30 = arith.constant dense<0xFF800000> : vector<16xf32>
    %83 = vector.multi_reduction <maximumf>, %82, %cst_30 [1] : vector<16x16xf32> to vector<16xf32>
    %84 = vector.shape_cast %83 : vector<16xf32> to vector<16x1xf32>
    %85 = vector.broadcast %84 : vector<16x1xf32> to vector<16x16xf32>
    %86 = arith.subf %82, %85 : vector<16x16xf32>
    %87 = math.exp %86 : vector<16x16xf32>
    %cst_31 = arith.constant dense<0.000000e+00> : vector<16xf32>
    %88 = vector.multi_reduction <add>, %87, %cst_31 [1] : vector<16x16xf32> to vector<16xf32>
    %89 = vector.shape_cast %88 : vector<16xf32> to vector<16x1xf32>
    %90 = tpu.reciprocal %89 {approx = true} : vector<16x1xf32> -> vector<16x1xf32>
    %91 = vector.broadcast %90 : vector<16x1xf32> to vector<16x16xf32>
    %92 = arith.mulf %87, %91 : vector<16x16xf32>
    %cst_32 = arith.constant dense<0.000000e+00> : vector<16x16xf32>
    %93 = tpu.matmul %92, %80, %cst_32 {dimension_numbers = #tpu.dot_dimension_numbers<[1], [0], [0], [1], [0, 0, 1, 1], [], []>} : vector<16x16xf32>, vector<16x16xf32>, vector<16x16xf32> -> vector<16x16xf32>
    %94 = vector.extract_strided_slice %54 {offsets = [0, 0], sizes = [16, 128], strides = [1, 1]} : vector<32x128xf32> to vector<16x128xf32>
    %cst_33 = arith.constant dense<0.000000e+00> : vector<16x128xf32>
    %95 = tpu.matmul %93, %94, %cst_33 {dimension_numbers = #tpu.dot_dimension_numbers<[1], [0], [0], [1], [0, 0, 1, 1], [], []>} : vector<16x16xf32>, vector<16x128xf32>, vector<16x128xf32> -> vector<16x128xf32>
    %96 = arith.addf %77, %95 : vector<16x128xf32>
    %97 = vector.extract_strided_slice %75 {offsets = [0, 16], sizes = [16, 16], strides = [1, 1]} : vector<16x128xf32> to vector<16x16xf32>
    %98 = vector.extract_strided_slice %75 {offsets = [0, 48], sizes = [16, 16], strides = [1, 1]} : vector<16x128xf32> to vector<16x16xf32>
    %99 = vector.extract_strided_slice %75 {offsets = [0, 80], sizes = [16, 16], strides = [1, 1]} : vector<16x128xf32> to vector<16x16xf32>
    %cst_34 = arith.constant dense<0.000000e+00> : vector<16x16xf32>
    %100 = tpu.matmul %97, %98, %cst_34 {dimension_numbers = #tpu.dot_dimension_numbers<[1], [1], [0], [0], [0, 0, 1, 0], [], []>} : vector<16x16xf32>, vector<16x16xf32>, vector<16x16xf32> -> vector<16x16xf32>
    %101 = arith.addf %100, %1 : vector<16x16xf32>
    %cst_35 = arith.constant dense<0xFF800000> : vector<16xf32>
    %102 = vector.multi_reduction <maximumf>, %101, %cst_35 [1] : vector<16x16xf32> to vector<16xf32>
    %103 = vector.shape_cast %102 : vector<16xf32> to vector<16x1xf32>
    %104 = vector.broadcast %103 : vector<16x1xf32> to vector<16x16xf32>
    %105 = arith.subf %101, %104 : vector<16x16xf32>
    %106 = math.exp %105 : vector<16x16xf32>
    %cst_36 = arith.constant dense<0.000000e+00> : vector<16xf32>
    %107 = vector.multi_reduction <add>, %106, %cst_36 [1] : vector<16x16xf32> to vector<16xf32>
    %108 = vector.shape_cast %107 : vector<16xf32> to vector<16x1xf32>
    %109 = tpu.reciprocal %108 {approx = true} : vector<16x1xf32> -> vector<16x1xf32>
    %110 = vector.broadcast %109 : vector<16x1xf32> to vector<16x16xf32>
    %111 = arith.mulf %106, %110 : vector<16x16xf32>
    %cst_37 = arith.constant dense<0.000000e+00> : vector<16x16xf32>
    %112 = tpu.matmul %111, %99, %cst_37 {dimension_numbers = #tpu.dot_dimension_numbers<[1], [0], [0], [1], [0, 0, 1, 1], [], []>} : vector<16x16xf32>, vector<16x16xf32>, vector<16x16xf32> -> vector<16x16xf32>
    %113 = vector.extract_strided_slice %54 {offsets = [16, 0], sizes = [16, 128], strides = [1, 1]} : vector<32x128xf32> to vector<16x128xf32>
    %cst_38 = arith.constant dense<0.000000e+00> : vector<16x128xf32>
    %114 = tpu.matmul %112, %113, %cst_38 {dimension_numbers = #tpu.dot_dimension_numbers<[1], [0], [0], [1], [0, 0, 1, 1], [], []>} : vector<16x16xf32>, vector<16x128xf32>, vector<16x128xf32> -> vector<16x128xf32>
    %115 = arith.addf %96, %114 : vector<16x128xf32>
    %116 = arith.addf %115, %0 : vector<16x128xf32>
    %cst_39 = arith.constant dense<0.000000e+00> : vector<16xf32>
    %117 = vector.multi_reduction <add>, %116, %cst_39 [1] : vector<16x128xf32> to vector<16xf32>
    %118 = vector.shape_cast %117 : vector<16xf32> to vector<16x1xf32>
    %cst_40 = arith.constant 3.125000e-02 : f32
    %119 = vector.broadcast %cst_40 : f32 to vector<16x1xf32>
    %120 = arith.mulf %118, %119 : vector<16x1xf32>
    %121 = vector.broadcast %120 : vector<16x1xf32> to vector<16x128xf32>
    %122 = arith.subf %116, %121 : vector<16x128xf32>
    %123 = arith.mulf %122, %10 : vector<16x128xf32>
    %124 = arith.mulf %123, %123 : vector<16x128xf32>
    %cst_41 = arith.constant dense<0.000000e+00> : vector<16xf32>
    %125 = vector.multi_reduction <add>, %124, %cst_41 [1] : vector<16x128xf32> to vector<16xf32>
    %126 = vector.shape_cast %125 : vector<16xf32> to vector<16x1xf32>
    %cst_42 = arith.constant 3.125000e-02 : f32
    %127 = vector.broadcast %cst_42 : f32 to vector<16x1xf32>
    %128 = arith.mulf %126, %127 : vector<16x1xf32>
    %cst_43 = arith.constant 9.99999974E-6 : f32
    %129 = vector.broadcast %cst_43 : f32 to vector<16x1xf32>
    %130 = arith.addf %128, %129 : vector<16x1xf32>
    %131 = math.rsqrt %130 : vector<16x1xf32>
    %132 = vector.broadcast %131 : vector<16x1xf32> to vector<16x128xf32>
    %133 = arith.mulf %123, %132 : vector<16x128xf32>
    %134 = vector.broadcast %69 : vector<1x128xf32> to vector<16x128xf32>
    %135 = arith.mulf %133, %134 : vector<16x128xf32>
    %136 = vector.broadcast %70 : vector<1x128xf32> to vector<16x128xf32>
    %137 = arith.addf %135, %136 : vector<16x128xf32>
    %138 = arith.mulf %137, %4 : vector<16x128xf32>
    %c1_i32_44 = arith.constant 1 : i32
    %139 = tpu.dynamic_rotate %138 by %c1_i32_44 dim 0 : vector<16x128xf32>, i32 -> vector<16x128xf32>
    %140 = arith.mulf %139, %30 : vector<16x128xf32>
    %c15_i32 = arith.constant 15 : i32
    %141 = tpu.dynamic_rotate %138 by %c15_i32 dim 0 : vector<16x128xf32>, i32 -> vector<16x128xf32>
    %142 = arith.mulf %141, %50 : vector<16x128xf32>
    %cst_45 = arith.constant dense<0.000000e+00> : vector<16x128xf32>
    %143 = tpu.matmul %140, %56, %cst_45 {dimension_numbers = #tpu.dot_dimension_numbers<[1], [0], [0], [1], [0, 0, 1, 1], [], []>} : vector<16x128xf32>, vector<128x128xf32>, vector<16x128xf32> -> vector<16x128xf32>
    %cst_46 = arith.constant dense<0.000000e+00> : vector<16x128xf32>
    %144 = tpu.matmul %138, %58, %cst_46 {dimension_numbers = #tpu.dot_dimension_numbers<[1], [0], [0], [1], [0, 0, 1, 1], [], []>} : vector<16x128xf32>, vector<128x128xf32>, vector<16x128xf32> -> vector<16x128xf32>
    %145 = arith.addf %143, %144 : vector<16x128xf32>
    %cst_47 = arith.constant dense<0.000000e+00> : vector<16x128xf32>
    %146 = tpu.matmul %142, %60, %cst_47 {dimension_numbers = #tpu.dot_dimension_numbers<[1], [0], [0], [1], [0, 0, 1, 1], [], []>} : vector<16x128xf32>, vector<128x128xf32>, vector<16x128xf32> -> vector<16x128xf32>
    %147 = arith.addf %145, %146 : vector<16x128xf32>
    %148 = vector.broadcast %67 : vector<1x128xf32> to vector<16x128xf32>
    %149 = arith.addf %147, %148 : vector<16x128xf32>
    %cst_48 = arith.constant 0.000000e+00 : f32
    %150 = vector.broadcast %cst_48 : f32 to vector<16x128xf32>
    %151 = arith.maximumf %149, %150 : vector<16x128xf32>
    %cst_49 = arith.constant dense<0.000000e+00> : vector<16x128xf32>
    %152 = tpu.matmul %151, %62, %cst_49 {dimension_numbers = #tpu.dot_dimension_numbers<[1], [0], [0], [1], [0, 0, 1, 1], [], []>} : vector<16x128xf32>, vector<128x128xf32>, vector<16x128xf32> -> vector<16x128xf32>
    %153 = vector.broadcast %68 : vector<1x128xf32> to vector<16x128xf32>
    %154 = arith.addf %152, %153 : vector<16x128xf32>
    %155 = arith.addf %154, %138 : vector<16x128xf32>
    %cst_50 = arith.constant dense<0.000000e+00> : vector<16xf32>
    %156 = vector.multi_reduction <add>, %155, %cst_50 [1] : vector<16x128xf32> to vector<16xf32>
    %157 = vector.shape_cast %156 : vector<16xf32> to vector<16x1xf32>
    %cst_51 = arith.constant 3.125000e-02 : f32
    %158 = vector.broadcast %cst_51 : f32 to vector<16x1xf32>
    %159 = arith.mulf %157, %158 : vector<16x1xf32>
    %160 = vector.broadcast %159 : vector<16x1xf32> to vector<16x128xf32>
    %161 = arith.subf %155, %160 : vector<16x128xf32>
    %162 = arith.mulf %161, %10 : vector<16x128xf32>
    %163 = arith.mulf %162, %162 : vector<16x128xf32>
    %cst_52 = arith.constant dense<0.000000e+00> : vector<16xf32>
    %164 = vector.multi_reduction <add>, %163, %cst_52 [1] : vector<16x128xf32> to vector<16xf32>
    %165 = vector.shape_cast %164 : vector<16xf32> to vector<16x1xf32>
    %cst_53 = arith.constant 3.125000e-02 : f32
    %166 = vector.broadcast %cst_53 : f32 to vector<16x1xf32>
    %167 = arith.mulf %165, %166 : vector<16x1xf32>
    %cst_54 = arith.constant 9.99999974E-6 : f32
    %168 = vector.broadcast %cst_54 : f32 to vector<16x1xf32>
    %169 = arith.addf %167, %168 : vector<16x1xf32>
    %170 = math.rsqrt %169 : vector<16x1xf32>
    %171 = vector.broadcast %170 : vector<16x1xf32> to vector<16x128xf32>
    %172 = arith.mulf %162, %171 : vector<16x128xf32>
    %173 = vector.broadcast %71 : vector<1x128xf32> to vector<16x128xf32>
    %174 = arith.mulf %172, %173 : vector<16x128xf32>
    %175 = vector.broadcast %72 : vector<1x128xf32> to vector<16x128xf32>
    %176 = arith.addf %174, %175 : vector<16x128xf32>
    %177 = arith.mulf %176, %4 : vector<16x128xf32>
    %c1 = arith.constant 1 : index
    %c0_55 = arith.constant 0 : index
    %c0_56 = arith.constant 0 : index
    %178 = vector.load %arg3[%c1, %c0_55, %c0_56] : memref<2x680x128xf32, #tpu.memory_space<vmem>>, vector<1x128x128xf32>
    %179 = vector.shape_cast %178 : vector<1x128x128xf32> to vector<128x128xf32>
    %c1_57 = arith.constant 1 : index
    %c128_58 = arith.constant 128 : index
    %c0_59 = arith.constant 0 : index
    %180 = vector.load %arg3[%c1_57, %c128_58, %c0_59] : memref<2x680x128xf32, #tpu.memory_space<vmem>>, vector<1x32x128xf32>
    %181 = vector.shape_cast %180 : vector<1x32x128xf32> to vector<32x128xf32>
    %c1_60 = arith.constant 1 : index
    %c160_61 = arith.constant 160 : index
    %c0_62 = arith.constant 0 : index
    %182 = vector.load %arg3[%c1_60, %c160_61, %c0_62] : memref<2x680x128xf32, #tpu.memory_space<vmem>>, vector<1x128x128xf32>
    %183 = vector.shape_cast %182 : vector<1x128x128xf32> to vector<128x128xf32>
    %c1_63 = arith.constant 1 : index
    %c288_64 = arith.constant 288 : index
    %c0_65 = arith.constant 0 : index
    %184 = vector.load %arg3[%c1_63, %c288_64, %c0_65] : memref<2x680x128xf32, #tpu.memory_space<vmem>>, vector<1x128x128xf32>
    %185 = vector.shape_cast %184 : vector<1x128x128xf32> to vector<128x128xf32>
    %c1_66 = arith.constant 1 : index
    %c416_67 = arith.constant 416 : index
    %c0_68 = arith.constant 0 : index
    %186 = vector.load %arg3[%c1_66, %c416_67, %c0_68] : memref<2x680x128xf32, #tpu.memory_space<vmem>>, vector<1x128x128xf32>
    %187 = vector.shape_cast %186 : vector<1x128x128xf32> to vector<128x128xf32>
    %c1_69 = arith.constant 1 : index
    %c544_70 = arith.constant 544 : index
    %c0_71 = arith.constant 0 : index
    %188 = vector.load %arg3[%c1_69, %c544_70, %c0_71] : memref<2x680x128xf32, #tpu.memory_space<vmem>>, vector<1x128x128xf32>
    %189 = vector.shape_cast %188 : vector<1x128x128xf32> to vector<128x128xf32>
    %c1_72 = arith.constant 1 : index
    %c672_73 = arith.constant 672 : index
    %c0_74 = arith.constant 0 : index
    %190 = vector.load %arg3[%c1_72, %c672_73, %c0_74] : memref<2x680x128xf32, #tpu.memory_space<vmem>>, vector<1x8x128xf32>
    %191 = vector.shape_cast %190 : vector<1x8x128xf32> to vector<8x128xf32>
    %192 = vector.extract_strided_slice %191 {offsets = [0, 0], sizes = [1, 128], strides = [1, 1]} : vector<8x128xf32> to vector<1x128xf32>
    %193 = vector.extract_strided_slice %191 {offsets = [1, 0], sizes = [1, 128], strides = [1, 1]} : vector<8x128xf32> to vector<1x128xf32>
    %194 = vector.extract_strided_slice %191 {offsets = [2, 0], sizes = [1, 128], strides = [1, 1]} : vector<8x128xf32> to vector<1x128xf32>
    %195 = vector.extract_strided_slice %191 {offsets = [3, 0], sizes = [1, 128], strides = [1, 1]} : vector<8x128xf32> to vector<1x128xf32>
    %196 = vector.extract_strided_slice %191 {offsets = [4, 0], sizes = [1, 128], strides = [1, 1]} : vector<8x128xf32> to vector<1x128xf32>
    %197 = vector.extract_strided_slice %191 {offsets = [5, 0], sizes = [1, 128], strides = [1, 1]} : vector<8x128xf32> to vector<1x128xf32>
    %198 = vector.extract_strided_slice %191 {offsets = [6, 0], sizes = [1, 128], strides = [1, 1]} : vector<8x128xf32> to vector<1x128xf32>
    %199 = vector.extract_strided_slice %191 {offsets = [7, 0], sizes = [1, 128], strides = [1, 1]} : vector<8x128xf32> to vector<1x128xf32>
    %cst_75 = arith.constant dense<0.000000e+00> : vector<16x128xf32>
    %200 = tpu.matmul %177, %179, %cst_75 {dimension_numbers = #tpu.dot_dimension_numbers<[1], [0], [0], [1], [0, 0, 1, 1], [], []>} : vector<16x128xf32>, vector<128x128xf32>, vector<16x128xf32> -> vector<16x128xf32>
    %201 = vector.broadcast %192 : vector<1x128xf32> to vector<16x128xf32>
    %202 = arith.addf %200, %201 : vector<16x128xf32>
    %203 = vector.shape_cast %193 : vector<1x128xf32> to vector<1x128xf32>
    %204 = vector.broadcast %203 : vector<1x128xf32> to vector<16x128xf32>
    %205 = vector.extract_strided_slice %202 {offsets = [0, 0], sizes = [16, 16], strides = [1, 1]} : vector<16x128xf32> to vector<16x16xf32>
    %206 = vector.extract_strided_slice %202 {offsets = [0, 32], sizes = [16, 16], strides = [1, 1]} : vector<16x128xf32> to vector<16x16xf32>
    %207 = vector.extract_strided_slice %202 {offsets = [0, 64], sizes = [16, 16], strides = [1, 1]} : vector<16x128xf32> to vector<16x16xf32>
    %cst_76 = arith.constant dense<0.000000e+00> : vector<16x16xf32>
    %208 = tpu.matmul %205, %206, %cst_76 {dimension_numbers = #tpu.dot_dimension_numbers<[1], [1], [0], [0], [0, 0, 1, 0], [], []>} : vector<16x16xf32>, vector<16x16xf32>, vector<16x16xf32> -> vector<16x16xf32>
    %209 = arith.addf %208, %1 : vector<16x16xf32>
    %cst_77 = arith.constant dense<0xFF800000> : vector<16xf32>
    %210 = vector.multi_reduction <maximumf>, %209, %cst_77 [1] : vector<16x16xf32> to vector<16xf32>
    %211 = vector.shape_cast %210 : vector<16xf32> to vector<16x1xf32>
    %212 = vector.broadcast %211 : vector<16x1xf32> to vector<16x16xf32>
    %213 = arith.subf %209, %212 : vector<16x16xf32>
    %214 = math.exp %213 : vector<16x16xf32>
    %cst_78 = arith.constant dense<0.000000e+00> : vector<16xf32>
    %215 = vector.multi_reduction <add>, %214, %cst_78 [1] : vector<16x16xf32> to vector<16xf32>
    %216 = vector.shape_cast %215 : vector<16xf32> to vector<16x1xf32>
    %217 = tpu.reciprocal %216 {approx = true} : vector<16x1xf32> -> vector<16x1xf32>
    %218 = vector.broadcast %217 : vector<16x1xf32> to vector<16x16xf32>
    %219 = arith.mulf %214, %218 : vector<16x16xf32>
    %cst_79 = arith.constant dense<0.000000e+00> : vector<16x16xf32>
    %220 = tpu.matmul %219, %207, %cst_79 {dimension_numbers = #tpu.dot_dimension_numbers<[1], [0], [0], [1], [0, 0, 1, 1], [], []>} : vector<16x16xf32>, vector<16x16xf32>, vector<16x16xf32> -> vector<16x16xf32>
    %221 = vector.extract_strided_slice %181 {offsets = [0, 0], sizes = [16, 128], strides = [1, 1]} : vector<32x128xf32> to vector<16x128xf32>
    %cst_80 = arith.constant dense<0.000000e+00> : vector<16x128xf32>
    %222 = tpu.matmul %220, %221, %cst_80 {dimension_numbers = #tpu.dot_dimension_numbers<[1], [0], [0], [1], [0, 0, 1, 1], [], []>} : vector<16x16xf32>, vector<16x128xf32>, vector<16x128xf32> -> vector<16x128xf32>
    %223 = arith.addf %204, %222 : vector<16x128xf32>
    %224 = vector.extract_strided_slice %202 {offsets = [0, 16], sizes = [16, 16], strides = [1, 1]} : vector<16x128xf32> to vector<16x16xf32>
    %225 = vector.extract_strided_slice %202 {offsets = [0, 48], sizes = [16, 16], strides = [1, 1]} : vector<16x128xf32> to vector<16x16xf32>
    %226 = vector.extract_strided_slice %202 {offsets = [0, 80], sizes = [16, 16], strides = [1, 1]} : vector<16x128xf32> to vector<16x16xf32>
    %cst_81 = arith.constant dense<0.000000e+00> : vector<16x16xf32>
    %227 = tpu.matmul %224, %225, %cst_81 {dimension_numbers = #tpu.dot_dimension_numbers<[1], [1], [0], [0], [0, 0, 1, 0], [], []>} : vector<16x16xf32>, vector<16x16xf32>, vector<16x16xf32> -> vector<16x16xf32>
    %228 = arith.addf %227, %1 : vector<16x16xf32>
    %cst_82 = arith.constant dense<0xFF800000> : vector<16xf32>
    %229 = vector.multi_reduction <maximumf>, %228, %cst_82 [1] : vector<16x16xf32> to vector<16xf32>
    %230 = vector.shape_cast %229 : vector<16xf32> to vector<16x1xf32>
    %231 = vector.broadcast %230 : vector<16x1xf32> to vector<16x16xf32>
    %232 = arith.subf %228, %231 : vector<16x16xf32>
    %233 = math.exp %232 : vector<16x16xf32>
    %cst_83 = arith.constant dense<0.000000e+00> : vector<16xf32>
    %234 = vector.multi_reduction <add>, %233, %cst_83 [1] : vector<16x16xf32> to vector<16xf32>
    %235 = vector.shape_cast %234 : vector<16xf32> to vector<16x1xf32>
    %236 = tpu.reciprocal %235 {approx = true} : vector<16x1xf32> -> vector<16x1xf32>
    %237 = vector.broadcast %236 : vector<16x1xf32> to vector<16x16xf32>
    %238 = arith.mulf %233, %237 : vector<16x16xf32>
    %cst_84 = arith.constant dense<0.000000e+00> : vector<16x16xf32>
    %239 = tpu.matmul %238, %226, %cst_84 {dimension_numbers = #tpu.dot_dimension_numbers<[1], [0], [0], [1], [0, 0, 1, 1], [], []>} : vector<16x16xf32>, vector<16x16xf32>, vector<16x16xf32> -> vector<16x16xf32>
    %240 = vector.extract_strided_slice %181 {offsets = [16, 0], sizes = [16, 128], strides = [1, 1]} : vector<32x128xf32> to vector<16x128xf32>
    %cst_85 = arith.constant dense<0.000000e+00> : vector<16x128xf32>
    %241 = tpu.matmul %239, %240, %cst_85 {dimension_numbers = #tpu.dot_dimension_numbers<[1], [0], [0], [1], [0, 0, 1, 1], [], []>} : vector<16x16xf32>, vector<16x128xf32>, vector<16x128xf32> -> vector<16x128xf32>
    %242 = arith.addf %223, %241 : vector<16x128xf32>
    %243 = arith.addf %242, %177 : vector<16x128xf32>
    %cst_86 = arith.constant dense<0.000000e+00> : vector<16xf32>
    %244 = vector.multi_reduction <add>, %243, %cst_86 [1] : vector<16x128xf32> to vector<16xf32>
    %245 = vector.shape_cast %244 : vector<16xf32> to vector<16x1xf32>
    %cst_87 = arith.constant 3.125000e-02 : f32
    %246 = vector.broadcast %cst_87 : f32 to vector<16x1xf32>
    %247 = arith.mulf %245, %246 : vector<16x1xf32>
    %248 = vector.broadcast %247 : vector<16x1xf32> to vector<16x128xf32>
    %249 = arith.subf %243, %248 : vector<16x128xf32>
    %250 = arith.mulf %249, %10 : vector<16x128xf32>
    %251 = arith.mulf %250, %250 : vector<16x128xf32>
    %cst_88 = arith.constant dense<0.000000e+00> : vector<16xf32>
    %252 = vector.multi_reduction <add>, %251, %cst_88 [1] : vector<16x128xf32> to vector<16xf32>
    %253 = vector.shape_cast %252 : vector<16xf32> to vector<16x1xf32>
    %cst_89 = arith.constant 3.125000e-02 : f32
    %254 = vector.broadcast %cst_89 : f32 to vector<16x1xf32>
    %255 = arith.mulf %253, %254 : vector<16x1xf32>
    %cst_90 = arith.constant 9.99999974E-6 : f32
    %256 = vector.broadcast %cst_90 : f32 to vector<16x1xf32>
    %257 = arith.addf %255, %256 : vector<16x1xf32>
    %258 = math.rsqrt %257 : vector<16x1xf32>
    %259 = vector.broadcast %258 : vector<16x1xf32> to vector<16x128xf32>
    %260 = arith.mulf %250, %259 : vector<16x128xf32>
    %261 = vector.broadcast %196 : vector<1x128xf32> to vector<16x128xf32>
    %262 = arith.mulf %260, %261 : vector<16x128xf32>
    %263 = vector.broadcast %197 : vector<1x128xf32> to vector<16x128xf32>
    %264 = arith.addf %262, %263 : vector<16x128xf32>
    %265 = arith.mulf %264, %4 : vector<16x128xf32>
    %c1_i32_91 = arith.constant 1 : i32
    %266 = tpu.dynamic_rotate %265 by %c1_i32_91 dim 0 : vector<16x128xf32>, i32 -> vector<16x128xf32>
    %267 = arith.mulf %266, %30 : vector<16x128xf32>
    %c15_i32_92 = arith.constant 15 : i32
    %268 = tpu.dynamic_rotate %265 by %c15_i32_92 dim 0 : vector<16x128xf32>, i32 -> vector<16x128xf32>
    %269 = arith.mulf %268, %50 : vector<16x128xf32>
    %cst_93 = arith.constant dense<0.000000e+00> : vector<16x128xf32>
    %270 = tpu.matmul %267, %183, %cst_93 {dimension_numbers = #tpu.dot_dimension_numbers<[1], [0], [0], [1], [0, 0, 1, 1], [], []>} : vector<16x128xf32>, vector<128x128xf32>, vector<16x128xf32> -> vector<16x128xf32>
    %cst_94 = arith.constant dense<0.000000e+00> : vector<16x128xf32>
    %271 = tpu.matmul %265, %185, %cst_94 {dimension_numbers = #tpu.dot_dimension_numbers<[1], [0], [0], [1], [0, 0, 1, 1], [], []>} : vector<16x128xf32>, vector<128x128xf32>, vector<16x128xf32> -> vector<16x128xf32>
    %272 = arith.addf %270, %271 : vector<16x128xf32>
    %cst_95 = arith.constant dense<0.000000e+00> : vector<16x128xf32>
    %273 = tpu.matmul %269, %187, %cst_95 {dimension_numbers = #tpu.dot_dimension_numbers<[1], [0], [0], [1], [0, 0, 1, 1], [], []>} : vector<16x128xf32>, vector<128x128xf32>, vector<16x128xf32> -> vector<16x128xf32>
    %274 = arith.addf %272, %273 : vector<16x128xf32>
    %275 = vector.broadcast %194 : vector<1x128xf32> to vector<16x128xf32>
    %276 = arith.addf %274, %275 : vector<16x128xf32>
    %cst_96 = arith.constant 0.000000e+00 : f32
    %277 = vector.broadcast %cst_96 : f32 to vector<16x128xf32>
    %278 = arith.maximumf %276, %277 : vector<16x128xf32>
    %cst_97 = arith.constant dense<0.000000e+00> : vector<16x128xf32>
    %279 = tpu.matmul %278, %189, %cst_97 {dimension_numbers = #tpu.dot_dimension_numbers<[1], [0], [0], [1], [0, 0, 1, 1], [], []>} : vector<16x128xf32>, vector<128x128xf32>, vector<16x128xf32> -> vector<16x128xf32>
    %280 = vector.broadcast %195 : vector<1x128xf32> to vector<16x128xf32>
    %281 = arith.addf %279, %280 : vector<16x128xf32>
    %282 = arith.addf %281, %265 : vector<16x128xf32>
    %cst_98 = arith.constant dense<0.000000e+00> : vector<16xf32>
    %283 = vector.multi_reduction <add>, %282, %cst_98 [1] : vector<16x128xf32> to vector<16xf32>
    %284 = vector.shape_cast %283 : vector<16xf32> to vector<16x1xf32>
    %cst_99 = arith.constant 3.125000e-02 : f32
    %285 = vector.broadcast %cst_99 : f32 to vector<16x1xf32>
    %286 = arith.mulf %284, %285 : vector<16x1xf32>
    %287 = vector.broadcast %286 : vector<16x1xf32> to vector<16x128xf32>
    %288 = arith.subf %282, %287 : vector<16x128xf32>
    %289 = arith.mulf %288, %10 : vector<16x128xf32>
    %290 = arith.mulf %289, %289 : vector<16x128xf32>
    %cst_100 = arith.constant dense<0.000000e+00> : vector<16xf32>
    %291 = vector.multi_reduction <add>, %290, %cst_100 [1] : vector<16x128xf32> to vector<16xf32>
    %292 = vector.shape_cast %291 : vector<16xf32> to vector<16x1xf32>
    %cst_101 = arith.constant 3.125000e-02 : f32
    %293 = vector.broadcast %cst_101 : f32 to vector<16x1xf32>
    %294 = arith.mulf %292, %293 : vector<16x1xf32>
    %cst_102 = arith.constant 9.99999974E-6 : f32
    %295 = vector.broadcast %cst_102 : f32 to vector<16x1xf32>
    %296 = arith.addf %294, %295 : vector<16x1xf32>
    %297 = math.rsqrt %296 : vector<16x1xf32>
    %298 = vector.broadcast %297 : vector<16x1xf32> to vector<16x128xf32>
    %299 = arith.mulf %289, %298 : vector<16x128xf32>
    %300 = vector.broadcast %198 : vector<1x128xf32> to vector<16x128xf32>
    %301 = arith.mulf %299, %300 : vector<16x128xf32>
    %302 = vector.broadcast %199 : vector<1x128xf32> to vector<16x128xf32>
    %303 = arith.addf %301, %302 : vector<16x128xf32>
    %304 = arith.mulf %303, %4 : vector<16x128xf32>
    %c0_103 = arith.constant 0 : index
    %c0_104 = arith.constant 0 : index
    %305 = vector.load %arg4[%c0_103, %c0_104] : memref<16x128xf32, #tpu.memory_space<vmem>>, vector<16x128xf32>
    tpu.vector_store %arg4[%c0_103, %c0_104], %304 {strides = array<i32>} : memref<16x128xf32, #tpu.memory_space<vmem>>, vector<16x128xf32>,
    return
  }
  func.func @transform_0(%arg0: i32) -> (i32, i32) {
    %c0_i32 = arith.constant 0 : i32
    %c0_i32_0 = arith.constant 0 : i32
    %c0_i32_1 = arith.constant 0 : i32
    return %c0_i32, %c0_i32_0 : i32, i32
  }
  func.func @transform_1(%arg0: i32) -> (i32, i32) {
    %c0_i32 = arith.constant 0 : i32
    %c0_i32_0 = arith.constant 0 : i32
    %c0_i32_1 = arith.constant 0 : i32
    return %c0_i32, %c0_i32_0 : i32, i32
  }
  func.func @transform_2(%arg0: i32) -> (i32, i32, i32) {
    %c0_i32 = arith.constant 0 : i32
    %c0_i32_0 = arith.constant 0 : i32
    %c0_i32_1 = arith.constant 0 : i32
    %c0_i32_2 = arith.constant 0 : i32
    return %c0_i32, %c0_i32_0, %c0_i32_1 : i32, i32, i32
  }
  func.func @transform_3(%arg0: i32) -> (i32, i32) {
    %c0_i32 = arith.constant 0 : i32
    %c0_i32_0 = arith.constant 0 : i32
    %c0_i32_1 = arith.constant 0 : i32
    return %c0_i32, %c0_i32_0 : i32, i32
  }
}

</mosaic_0001>

<llo_original>
// kernel: encoder_forward.1
$region0: #{encoder_forward.1}
  #allocation0 [shape = 'u32[]', space=smem, size = 0x4, offset = 0x4, fixed_abs, tag = 'smem constant byte address 0x4 - core index']
  #allocation1 [shape = 'u32[72,128]{1,0:T(1,128)}', space=vmem, size = 0x9000, scoped, tag = 'internal scratch']
  %s0 = inlined_call_operand.vmem [shape: f32[16,128], index: 0, kind: input, shape index: {}]
  %s1 = inlined_call_operand.vmem [shape: f32[16,128], index: 1, kind: input, shape index: {}]
  %s2 = inlined_call_operand.vmem [shape: f32[2,680,128], index: 2, kind: input, shape index: {}]
  %s3 = inlined_call_operand.vmem [shape: f32[16,128], index: 3, kind: output, shape index: {}]
  %s4 = sld [smem:[#allocation0]]
  $region22: #{encoder_forward.1} parent=0
    _
  %s6 = ssub.s32 1, %s4
  %s7 = scalar_select 0, %s6, %s4
  // Predicated region
  $region2: #{encoder_forward.1} parent=0 // pred_check
    _
  $region3: #{encoder_forward.1} parent=0 // pred_check_branch
    %9 = sbr.rel (0) target = $region5
  $region4: #{encoder_forward.1} parent=0 // pred_region
    _
  $region5: #{encoder_forward.1} parent=0 // pred_fallthru
    _
  // Predicated region
  $region6: #{encoder_forward.1} parent=0 // pred_check
    _
  $region7: #{encoder_forward.1} parent=0 // pred_check_branch
    %11 = sbr.rel (0) target = $region9
  $region8: #{encoder_forward.1} parent=0 // pred_region
    _
  $region9: #{encoder_forward.1} parent=0 // pred_fallthru
    _
  // Predicated region
  $region10: #{encoder_forward.1} parent=0 // pred_check
    _
  $region11: #{encoder_forward.1} parent=0 // pred_check_branch
    %13 = sbr.rel (0) target = $region13
  $region12: #{encoder_forward.1} parent=0 // pred_region
    _
  $region13: #{encoder_forward.1} parent=0 // pred_fallthru
    _
  %v14 = vld [vmem:[%s0] sm:$0xff]
  %v15 = vld [vmem:[%s0 + $0x8] sm:$0xff]
  %v16 = vld [vmem:[%s1] sm:$0xff]
  %v17 = vld [vmem:[%s1 + $0x8] sm:$0xff]
  %19 = vset.pattern.permute.xlu0 16
  %20 = vperm.xlu0 %19, %v16
  %v21 = vpop.permute.xlu0 %20
  %24 = vset.pattern.permute.xlu0 16
  %25 = vperm.xlu0 %24, %v17
  %v26 = vpop.permute.xlu0 %25
  %v28 = vlaneseq
  %v29 = vshrl.u32 %v28, 7
  %v30 = vadd.s32 %v29, 8
  %v31 = vlaneseq
  %v32 = vand.u32 %v31, 127
  %vm33 = vcmp.lt.s32.totalorder %v32, 32
  %v34 = vsel %vm33, 1, 0
  %v35 = vcvt.s32.f32 %v34
  %vm36 = vcmp.lt.s32.totalorder %v29, 0
  %v37 = vsub.s32 0, %v29
  %v38 = vsel %vm36, %v37, %v29
  %v39 = vshrl.u32 %v38, 3
  %v40 = vand.u32 %v38, 7
  %v41 = vsub.s32 0, %v40
  %v42 = vsel %vm36, %v41, %v40
  %vm43 = vcmp.lt.s32.totalorder %v30, 0
  %v44 = vsub.s32 0, %v30
  %v45 = vsel %vm43, %v44, %v30
  %v46 = vshrl.u32 %v45, 3
  %v47 = vand.u32 %v45, 7
  %v48 = vsub.s32 0, %v47
  %v49 = vsel %vm43, %v48, %v47
  %vm50 = vcmp.ne.s32.totalorder %v42, 0
  %vm51 = vcmp.ne.s32.totalorder %v49, 0
  %vm52 = vcmp.lt.s32.totalorder %v42, 0
  %vm53 = vcmp.lt.s32.totalorder %v49, 0
  %vm54 = vmand %vm52, %vm50
  %vm55 = vmand %vm53, %vm51
  %v56 = vadd.s32 %v42, 8
  %v57 = vadd.s32 %v49, 8
  %v58 = vsel %vm54, %v56, %v42
  %v59 = vsel %vm55, %v57, %v49
  %vm60 = vcmp.ne.s32.totalorder %v58, 0
  %vm61 = vcmp.ne.s32.totalorder %v59, 0
  %v62 = vsel %vm60, 1, 0
  %v63 = vsel %vm61, 1, 0
  %v64 = vcvt.s32.f32 %v62
  %v65 = vcvt.s32.f32 %v63
  %vm66 = vcmp.ne.s32.totalorder %v58, 7
  %vm67 = vcmp.ne.s32.totalorder %v59, 7
  %v68 = vsel %vm66, 1, 0
  %v69 = vsel %vm67, 1, 0
  %v70 = vcvt.s32.f32 %v68
  %v71 = vcvt.s32.f32 %v69
  %v72 = vld [vmem:[%s2] sm:$0xff]
  %v73 = vld [vmem:[%s2 + $0x8] sm:$0xff]
  %v74 = vld [vmem:[%s2 + $0x10] sm:$0xff]
  %v75 = vld [vmem:[%s2 + $0x18] sm:$0xff]
  %v76 = vld [vmem:[%s2 + $0x20] sm:$0xff]
  %v77 = vld [vmem:[%s2 + $0x28] sm:$0xff]
  %v78 = vld [vmem:[%s2 + $0x30] sm:$0xff]
  %v79 = vld [vmem:[%s2 + $0x38] sm:$0xff]
  %v80 = vld [vmem:[%s2 + $0x40] sm:$0xff]
  %v81 = vld [vmem:[%s2 + $0x48] sm:$0xff]
  %v82 = vld [vmem:[%s2 + $0x50] sm:$0xff]
  %v83 = vld [vmem:[%s2 + $0x58] sm:$0xff]
  %v84 = vld [vmem:[%s2 + $0x60] sm:$0xff]
  %v85 = vld [vmem:[%s2 + $0x68] sm:$0xff]
  %v86 = vld [vmem:[%s2 + $0x70] sm:$0xff]
  %v87 = vld [vmem:[%s2 + $0x78] sm:$0xff]
  %v88 = vld [vmem:[%s2 + $0x80] sm:$0xff]
  %v89 = vld [vmem:[%s2 + $0x88] sm:$0xff]
  %v90 = vld [vmem:[%s2 + $0x90] sm:$0xff]
  %v91 = vld [vmem:[%s2 + $0x98] sm:$0xff]
  %v92 = vld [vmem:[%s2 + $0xa0] sm:$0xff]
  %v93 = vld [vmem:[%s2 + $0xa8] sm:$0xff]
  %v94 = vld [vmem:[%s2 + $0xb0] sm:$0xff]
  %v95 = vld [vmem:[%s2 + $0xb8] sm:$0xff]
  %v96 = vld [vmem:[%s2 + $0xc0] sm:$0xff]
  %v97 = vld [vmem:[%s2 + $0xc8] sm:$0xff]
  %v98 = vld [vmem:[%s2 + $0xd0] sm:$0xff]
  %v99 = vld [vmem:[%s2 + $0xd8] sm:$0xff]
  %v100 = vld [vmem:[%s2 + $0xe0] sm:$0xff]
  %v101 = vld [vmem:[%s2 + $0xe8] sm:$0xff]
  %v102 = vld [vmem:[%s2 + $0xf0] sm:$0xff]
  %v103 = vld [vmem:[%s2 + $0xf8] sm:$0xff]
  %v104 = vld [vmem:[%s2 + $0x100] sm:$0xff]
  %v105 = vld [vmem:[%s2 + $0x108] sm:$0xff]
  %v106 = vld [vmem:[%s2 + $0x110] sm:$0xff]
  %v107 = vld [vmem:[%s2 + $0x118] sm:$0xff]
  %v108 = vld [vmem:[%s2 + $0x120] sm:$0xff]
  %v109 = vld [vmem:[%s2 + $0x128] sm:$0xff]
  %v110 = vld [vmem:[%s2 + $0x130] sm:$0xff]
  %v111 = vld [vmem:[%s2 + $0x138] sm:$0xff]
  %v112 = vld [vmem:[%s2 + $0x140] sm:$0xff]
  %v113 = vld [vmem:[%s2 + $0x148] sm:$0xff]
  %v114 = vld [vmem:[%s2 + $0x150] sm:$0xff]
  %v115 = vld [vmem:[%s2 + $0x158] sm:$0xff]
  %v116 = vld [vmem:[%s2 + $0x160] sm:$0xff]
  %v117 = vld [vmem:[%s2 + $0x168] sm:$0xff]
  %v118 = vld [vmem:[%s2 + $0x170] sm:$0xff]
  %v119 = vld [vmem:[%s2 + $0x178] sm:$0xff]
  %v120 = vld [vmem:[%s2 + $0x180] sm:$0xff]
  %v121 = vld [vmem:[%s2 + $0x188] sm:$0xff]
  %v122 = vld [vmem:[%s2 + $0x190] sm:$0xff]
  %v123 = vld [vmem:[%s2 + $0x198] sm:$0xff]
  %v124 = vld [vmem:[%s2 + $0x1a0] sm:$0xff]
  %v125 = vld [vmem:[%s2 + $0x1a8] sm:$0xff]
  %v126 = vld [vmem:[%s2 + $0x1b0] sm:$0xff]
  %v127 = vld [vmem:[%s2 + $0x1b8] sm:$0xff]
  %v128 = vld [vmem:[%s2 + $0x1c0] sm:$0xff]
  %v129 = vld [vmem:[%s2 + $0x1c8] sm:$0xff]
  %v130 = vld [vmem:[%s2 + $0x1d0] sm:$0xff]
  %v131 = vld [vmem:[%s2 + $0x1d8] sm:$0xff]
  %v132 = vld [vmem:[%s2 + $0x1e0] sm:$0xff]
  %v133 = vld [vmem:[%s2 + $0x1e8] sm:$0xff]
  %v134 = vld [vmem:[%s2 + $0x1f0] sm:$0xff]
  %v135 = vld [vmem:[%s2 + $0x1f8] sm:$0xff]
  %v136 = vld [vmem:[%s2 + $0x200] sm:$0xff]
  %v137 = vld [vmem:[%s2 + $0x208] sm:$0xff]
  %v138 = vld [vmem:[%s2 + $0x210] sm:$0xff]
  %v139 = vld [vmem:[%s2 + $0x218] sm:$0xff]
  %v140 = vld [vmem:[%s2 + $0x220] sm:$0xff]
  %v141 = vld [vmem:[%s2 + $0x228] sm:$0xff]
  %v142 = vld [vmem:[%s2 + $0x230] sm:$0xff]
  %v143 = vld [vmem:[%s2 + $0x238] sm:$0xff]
  %v144 = vld [vmem:[%s2 + $0x240] sm:$0xff]
  %v145 = vld [vmem:[%s2 + $0x248] sm:$0xff]
  %v146 = vld [vmem:[%s2 + $0x250] sm:$0xff]
  %v147 = vld [vmem:[%s2 + $0x258] sm:$0xff]
  %v148 = vld [vmem:[%s2 + $0x260] sm:$0xff]
  %v149 = vld [vmem:[%s2 + $0x268] sm:$0xff]
  %v150 = vld [vmem:[%s2 + $0x270] sm:$0xff]
  %v151 = vld [vmem:[%s2 + $0x278] sm:$0xff]
  %v152 = vld [vmem:[%s2 + $0x280] sm:$0xff]
  %v153 = vld [vmem:[%s2 + $0x288] sm:$0xff]
  %v154 = vld [vmem:[%s2 + $0x290] sm:$0xff]
  %v155 = vld [vmem:[%s2 + $0x298] sm:$0xff]
  %v156 = vld [vmem:[%s2 + $0x2a0] sm:$0xff]
  %v157 = vperm.slane %v156, 0
  %158 = vmatpush.msra.mxu0 %v87
  %159 = vmatpush.msra.mxu0 %v86
  %160 = vmatpush.msra.mxu0 %v85
  %161 = vmatpush.msra.mxu0 %v84
  %162 = vmatpush.msra.mxu0 %v83
  %163 = vmatpush.msra.mxu0 %v82
  %164 = vmatpush.msra.mxu0 %v81
  %165 = vmatpush.msra.mxu0 %v80
  %166 = vmatpush.msra.mxu0 %v79
  %167 = vmatpush.msra.mxu0 %v78
  %168 = vmatpush.msra.mxu0 %v77
  %169 = vmatpush.msra.mxu0 %v76
  %170 = vmatpush.msra.mxu0 %v75
  %171 = vmatpush.msra.mxu0 %v74
  %172 = vmatpush.msra.mxu0 %v73
  %173 = vmatpush.msra.mxu0 %v72
  %174 = vmatmul.f32.gmra.mxu0 %v14
  %v175 = vpop.f32.mrf.mxu0
  %v176 = vadd.f32 %v157, %v175
  %177 = vmatmul.f32.gmra.mxu0 %v15
  %v178 = vpop.f32.mrf.mxu0
  %v179 = vadd.f32 %v157, %v178
  %180 = vdwg.mxu0
  %v181 = vperm.slane %v156, 1
  %184 = vrot.lane.b32.xlu0 %v176, 96
  %v185 = vpop.permute.xlu0 %184
  %186 = vrot.lane.b32.xlu0 %v179, 96
  %v187 = vpop.permute.xlu0 %186
  %vm188 = vcmask 130048
  %v189 = vsel %vm188, %v176, 0
  %v191 = vsel %vm188, %v179, 0
  %v193 = vsel %vm188, %v185, 0
  %v195 = vsel %vm188, %v187, 0
  %197 = vmatpush.xpose.msra.mxu0 0.0
  %198 = vmatpush.xpose.msra.mxu0 0.0
  %199 = vmatpush.xpose.msra.mxu0 0.0
  %200 = vmatpush.xpose.msra.mxu0 0.0
  %201 = vmatpush.xpose.msra.mxu0 0.0
  %202 = vmatpush.xpose.msra.mxu0 0.0
  %203 = vmatpush.xpose.msra.mxu0 0.0
  %204 = vmatpush.xpose.msra.mxu0 0.0
  %205 = vmatpush.xpose.msra.mxu0 0.0
  %206 = vmatpush.xpose.msra.mxu0 0.0
  %207 = vmatpush.xpose.msra.mxu0 0.0
  %208 = vmatpush.xpose.msra.mxu0 0.0
  %209 = vmatpush.xpose.msra.mxu0 0.0
  %210 = vmatpush.xpose.msra.mxu0 0.0
  %211 = vmatpush.xpose.msra.mxu0 %v195
  %212 = vmatpush.xpose.msra.mxu0 %v193
  %213 = vmatmul.f32.gmra.mxu0 %v189
  %v214 = vpop.f32.mrf.mxu0
  %v215 = vadd.f32 %v16, %v214
  %216 = vmatmul.f32.gmra.mxu0 %v191
  %v217 = vpop.f32.mrf.mxu0
  %v218 = vadd.f32 %v17, %v217
  %219 = vdwg.mxu0
  %v220 = vsel %vm188, %v215, -inf
  %221 = vmax.xlane.f32.xlu0 %v220
  %v222 = vpop.xlane.xlu0 %221
  %v223 = vsel %vm188, %v218, -inf
  %224 = vmax.xlane.f32.xlu0 %v223
  %v225 = vpop.xlane.xlu0 %224
  %v226 = vsub.f32 %v215, %v222
  %v227 = vsub.f32 %v218, %v225
  %v228 = vmul.f32 %v226, 1.442695
  %v229 = vpow.pop %v228
  %v230 = vmul.f32 %v227, 1.442695
  %v231 = vpow.pop %v230
  %v232 = vsel %vm188, %v229, 0.0
  %233 = vadd.xlane.f32.xlu0 %v232
  %v234 = vpop.xlane.xlu0 %233
  %v235 = vsel %vm188, %v231, 0.0
  %236 = vadd.xlane.f32.xlu0 %v235
  %v237 = vpop.xlane.xlu0 %236
  %v238 = vrcp.pop %v234
  %v239 = vrcp.pop %v237
  %v240 = vmul.f32 %v229, %v238
  %v241 = vmul.f32 %v231, %v239
  %242 = vrot.lane.b32.xlu0 %v176, 64
  %v243 = vpop.permute.xlu0 %242
  %244 = vrot.lane.b32.xlu0 %v179, 64
  %v245 = vpop.permute.xlu0 %244
  %v249 = vsel %vm188, %v240, 0
  %v252 = vsel %vm188, %v241, 0
  %254 = vmatpush.msra.mxu0 0.0
  %255 = vmatpush.msra.mxu0 0.0
  %256 = vmatpush.msra.mxu0 0.0
  %257 = vmatpush.msra.mxu0 0.0
  %258 = vmatpush.msra.mxu0 0.0
  %259 = vmatpush.msra.mxu0 0.0
  %260 = vmatpush.msra.mxu0 0.0
  %261 = vmatpush.msra.mxu0 0.0
  %262 = vmatpush.msra.mxu0 0.0
  %263 = vmatpush.msra.mxu0 0.0
  %264 = vmatpush.msra.mxu0 0.0
  %265 = vmatpush.msra.mxu0 0.0
  %266 = vmatpush.msra.mxu0 0.0
  %267 = vmatpush.msra.mxu0 0.0
  %268 = vmatpush.msra.mxu0 %v245
  %269 = vmatpush.msra.mxu0 %v243
  %270 = vmatmul.f32.gmra.mxu0 %v249
  %v271 = vpop.f32.mrf.mxu0
  %v272 = vadd.f32 0.0, %v271
  %273 = vmatmul.f32.gmra.mxu0 %v252
  %v274 = vpop.f32.mrf.mxu0
  %v275 = vadd.f32 0.0, %v274
  %276 = vdwg.mxu0
  %v278 = vsel %vm188, %v272, 0
  %v281 = vsel %vm188, %v275, 0
  %283 = vmatpush.msra.mxu0 0.0
  %284 = vmatpush.msra.mxu0 0.0
  %285 = vmatpush.msra.mxu0 0.0
  %286 = vmatpush.msra.mxu0 0.0
  %287 = vmatpush.msra.mxu0 0.0
  %288 = vmatpush.msra.mxu0 0.0
  %289 = vmatpush.msra.mxu0 0.0
  %290 = vmatpush.msra.mxu0 0.0
  %291 = vmatpush.msra.mxu0 0.0
  %292 = vmatpush.msra.mxu0 0.0
  %293 = vmatpush.msra.mxu0 0.0
  %294 = vmatpush.msra.mxu0 0.0
  %295 = vmatpush.msra.mxu0 0.0
  %296 = vmatpush.msra.mxu0 0.0
  %297 = vmatpush.msra.mxu0 %v89
  %298 = vmatpush.msra.mxu0 %v88
  %299 = vmatmul.f32.gmra.mxu0 %v278
  %v300 = vpop.f32.mrf.mxu0
  %v301 = vadd.f32 0.0, %v300
  %302 = vmatmul.f32.gmra.mxu0 %v281
  %v303 = vpop.f32.mrf.mxu0
  %v304 = vadd.f32 0.0, %v303
  %305 = vdwg.mxu0
  %v306 = vadd.f32 %v181, %v301
  %v307 = vadd.f32 %v181, %v304
  %308 = vrot.lane.b32.xlu0 %v176, 112
  %v309 = vpop.permute.xlu0 %308
  %310 = vrot.lane.b32.xlu0 %v179, 112
  %v311 = vpop.permute.xlu0 %310
  %312 = vrot.lane.b32.xlu0 %v176, 80
  %v313 = vpop.permute.xlu0 %312
  %314 = vrot.lane.b32.xlu0 %v179, 80
  %v315 = vpop.permute.xlu0 %314
  %v316 = vsel %vm188, %v309, 0
  %v318 = vsel %vm188, %v311, 0
  %v320 = vsel %vm188, %v313, 0
  %v322 = vsel %vm188, %v315, 0
  %324 = vmatpush.xpose.msra.mxu0 0.0
  %325 = vmatpush.xpose.msra.mxu0 0.0
  %326 = vmatpush.xpose.msra.mxu0 0.0
  %327 = vmatpush.xpose.msra.mxu0 0.0
  %328 = vmatpush.xpose.msra.mxu0 0.0
  %329 = vmatpush.xpose.msra.mxu0 0.0
  %330 = vmatpush.xpose.msra.mxu0 0.0
  %331 = vmatpush.xpose.msra.mxu0 0.0
  %332 = vmatpush.xpose.msra.mxu0 0.0
  %333 = vmatpush.xpose.msra.mxu0 0.0
  %334 = vmatpush.xpose.msra.mxu0 0.0
  %335 = vmatpush.xpose.msra.mxu0 0.0
  %336 = vmatpush.xpose.msra.mxu0 0.0
  %337 = vmatpush.xpose.msra.mxu0 0.0
  %338 = vmatpush.xpose.msra.mxu0 %v322
  %339 = vmatpush.xpose.msra.mxu0 %v320
  %340 = vmatmul.f32.gmra.mxu0 %v316
  %v341 = vpop.f32.mrf.mxu0
  %v342 = vadd.f32 %v16, %v341
  %343 = vmatmul.f32.gmra.mxu0 %v318
  %v344 = vpop.f32.mrf.mxu0
  %v345 = vadd.f32 %v17, %v344
  %346 = vdwg.mxu0
  %v347 = vsel %vm188, %v342, -inf
  %348 = vmax.xlane.f32.xlu0 %v347
  %v349 = vpop.xlane.xlu0 %348
  %v350 = vsel %vm188, %v345, -inf
  %351 = vmax.xlane.f32.xlu0 %v350
  %v352 = vpop.xlane.xlu0 %351
  %v353 = vsub.f32 %v342, %v349
  %v354 = vsub.f32 %v345, %v352
  %v355 = vmul.f32 %v353, 1.442695
  %v356 = vpow.pop %v355
  %v357 = vmul.f32 %v354, 1.442695
  %v358 = vpow.pop %v357
  %v359 = vsel %vm188, %v356, 0.0
  %360 = vadd.xlane.f32.xlu0 %v359
  %v361 = vpop.xlane.xlu0 %360
  %v362 = vsel %vm188, %v358, 0.0
  %363 = vadd.xlane.f32.xlu0 %v362
  %v364 = vpop.xlane.xlu0 %363
  %v365 = vrcp.pop %v361
  %v366 = vrcp.pop %v364
  %v367 = vmul.f32 %v356, %v365
  %v368 = vmul.f32 %v358, %v366
  %369 = vrot.lane.b32.xlu0 %v176, 48
  %v370 = vpop.permute.xlu0 %369
  %371 = vrot.lane.b32.xlu0 %v179, 48
  %v372 = vpop.permute.xlu0 %371
  %v376 = vsel %vm188, %v367, 0
  %v379 = vsel %vm188, %v368, 0
  %381 = vmatpush.msra.mxu0 0.0
  %382 = vmatpush.msra.mxu0 0.0
  %383 = vmatpush.msra.mxu0 0.0
  %384 = vmatpush.msra.mxu0 0.0
  %385 = vmatpush.msra.mxu0 0.0
  %386 = vmatpush.msra.mxu0 0.0
  %387 = vmatpush.msra.mxu0 0.0
  %388 = vmatpush.msra.mxu0 0.0
  %389 = vmatpush.msra.mxu0 0.0
  %390 = vmatpush.msra.mxu0 0.0
  %391 = vmatpush.msra.mxu0 0.0
  %392 = vmatpush.msra.mxu0 0.0
  %393 = vmatpush.msra.mxu0 0.0
  %394 = vmatpush.msra.mxu0 0.0
  %395 = vmatpush.msra.mxu0 %v372
  %396 = vmatpush.msra.mxu0 %v370
  %397 = vmatmul.f32.gmra.mxu0 %v376
  %v398 = vpop.f32.mrf.mxu0
  %v399 = vadd.f32 0.0, %v398
  %400 = vmatmul.f32.gmra.mxu0 %v379
  %v401 = vpop.f32.mrf.mxu0
  %v402 = vadd.f32 0.0, %v401
  %403 = vdwg.mxu0
  %v405 = vsel %vm188, %v399, 0
  %v408 = vsel %vm188, %v402, 0
  %410 = vmatpush.msra.mxu0 0.0
  %411 = vmatpush.msra.mxu0 0.0
  %412 = vmatpush.msra.mxu0 0.0
  %413 = vmatpush.msra.mxu0 0.0
  %414 = vmatpush.msra.mxu0 0.0
  %415 = vmatpush.msra.mxu0 0.0
  %416 = vmatpush.msra.mxu0 0.0
  %417 = vmatpush.msra.mxu0 0.0
  %418 = vmatpush.msra.mxu0 0.0
  %419 = vmatpush.msra.mxu0 0.0
  %420 = vmatpush.msra.mxu0 0.0
  %421 = vmatpush.msra.mxu0 0.0
  %422 = vmatpush.msra.mxu0 0.0
  %423 = vmatpush.msra.mxu0 0.0
  %424 = vmatpush.msra.mxu0 %v91
  %425 = vmatpush.msra.mxu0 %v90
  %426 = vmatmul.f32.gmra.mxu0 %v405
  %v427 = vpop.f32.mrf.mxu0
  %v428 = vadd.f32 0.0, %v427
  %429 = vmatmul.f32.gmra.mxu0 %v408
  %v430 = vpop.f32.mrf.mxu0
  %v431 = vadd.f32 0.0, %v430
  %432 = vdwg.mxu0
  %v433 = vadd.f32 %v306, %v428
  %v434 = vadd.f32 %v307, %v431
  %v435 = vadd.f32 %v433, %v14
  %v436 = vadd.f32 %v434, %v15
  %437 = vadd.xlane.f32.xlu0 %v435
  %v438 = vpop.xlane.xlu0 %437
  %439 = vadd.xlane.f32.xlu0 %v436
  %v440 = vpop.xlane.xlu0 %439
  %v441 = vmul.f32 %v438, 0.03125
  %v442 = vmul.f32 %v440, 0.03125
  %v443 = vsub.f32 %v435, %v441
  %v444 = vsub.f32 %v436, %v442
  %v445 = vmul.f32 %v443, %v35
  %v446 = vmul.f32 %v444, %v35
  %v447 = vmul.f32 %v445, %v445
  %v448 = vmul.f32 %v446, %v446
  %449 = vadd.xlane.f32.xlu0 %v447
  %v450 = vpop.xlane.xlu0 %449
  %451 = vadd.xlane.f32.xlu0 %v448
  %v452 = vpop.xlane.xlu0 %451
  %v453 = vmul.f32 %v450, 0.03125
  %v454 = vmul.f32 %v452, 0.03125
  %v455 = vadd.f32 %v453, 1e-05
  %v456 = vadd.f32 %v454, 1e-05
  %v457 = vrsqrt.pop %v455
  %v458 = vmul.f32 %v457, %v455
  %v459 = vmul.f32 %v458, %v457
  %v460 = vmul.f32 0.5, %v459
  %v461 = vsub.f32 1.5, %v460
  %v462 = vmul.f32 %v457, %v461
  %vm463 = vweird.f32 %v455
  %vm464 = vweird.f32 %v457
  %vm465 = vmor %vm463, %vm464
  %v466 = vsel %vm465, %v457, %v462
  %v467 = vrsqrt.pop %v456
  %v468 = vmul.f32 %v467, %v456
  %v469 = vmul.f32 %v468, %v467
  %v470 = vmul.f32 0.5, %v469
  %v471 = vsub.f32 1.5, %v470
  %v472 = vmul.f32 %v467, %v471
  %vm473 = vweird.f32 %v456
  %vm474 = vweird.f32 %v467
  %vm475 = vmor %vm473, %vm474
  %v476 = vsel %vm475, %v467, %v472
  %v477 = vmul.f32 %v445, %v466
  %v478 = vmul.f32 %v446, %v476
  %v479 = vperm.slane %v156, 4
  %v480 = vmul.f32 %v477, %v479
  %v481 = vmul.f32 %v478, %v479
  %v482 = vperm.slane %v156, 5
  %v483 = vadd.f32 %v480, %v482
  %v484 = vadd.f32 %v481, %v482
  %v485 = vmul.f32 %v483, %v21
  %v486 = vmul.f32 %v484, %v26
  %v487 = vrot.slane %v485, 7
  %v488 = vrot.slane %v486, 7
  %vm489 = vcmp.lt.s32.totalorder %v29, 1
  %v490 = vsel %vm489, %v487, %v488
  %v491 = vsel %vm489, %v488, %v487
  %v492 = vmul.f32 %v491, %v64
  %v493 = vmul.f32 %v490, %v65
  %v494 = vrot.slane %v485, 1
  %v495 = vrot.slane %v486, 1
  %vm496 = vcmp.lt.s32.totalorder %v29, 7
  %v497 = vsel %vm496, %v494, %v495
  %v498 = vsel %vm496, %v495, %v494
  %v499 = vmul.f32 %v497, %v70
  %v500 = vmul.f32 %v498, %v71
  %501 = vmatpush.msra.mxu0 %v123
  %502 = vmatpush.msra.mxu0 %v122
  %503 = vmatpush.msra.mxu0 %v121
  %504 = vmatpush.msra.mxu0 %v120
  %505 = vmatpush.msra.mxu0 %v119
  %506 = vmatpush.msra.mxu0 %v118
  %507 = vmatpush.msra.mxu0 %v117
  %508 = vmatpush.msra.mxu0 %v116
  %509 = vmatpush.msra.mxu0 %v115
  %510 = vmatpush.msra.mxu0 %v114
  %511 = vmatpush.msra.mxu0 %v113
  %512 = vmatpush.msra.mxu0 %v112
  %513 = vmatpush.msra.mxu0 %v111
  %514 = vmatpush.msra.mxu0 %v110
  %515 = vmatpush.msra.mxu0 %v109
  %516 = vmatpush.msra.mxu0 %v108
  %517 = vmatmul.f32.gmra.mxu0 %v485
  %v518 = vpop.f32.mrf.mxu0
  %v519 = vadd.f32 0.0, %v518
  %520 = vmatmul.f32.gmra.mxu0 %v486
  %v521 = vpop.f32.mrf.mxu0
  %v522 = vadd.f32 0.0, %v521
  %523 = vdwg.mxu0
  %524 = vmatpush.msra.mxu0 %v107
  %525 = vmatpush.msra.mxu0 %v106
  %526 = vmatpush.msra.mxu0 %v105
  %527 = vmatpush.msra.mxu0 %v104
  %528 = vmatpush.msra.mxu0 %v103
  %529 = vmatpush.msra.mxu0 %v102
  %530 = vmatpush.msra.mxu0 %v101
  %531 = vmatpush.msra.mxu0 %v100
  %532 = vmatpush.msra.mxu0 %v99
  %533 = vmatpush.msra.mxu0 %v98
  %534 = vmatpush.msra.mxu0 %v97
  %535 = vmatpush.msra.mxu0 %v96
  %536 = vmatpush.msra.mxu0 %v95
  %537 = vmatpush.msra.mxu0 %v94
  %538 = vmatpush.msra.mxu0 %v93
  %539 = vmatpush.msra.mxu0 %v92
  %540 = vmatmul.f32.gmra.mxu0 %v492
  %v541 = vpop.f32.mrf.mxu0
  %v542 = vadd.f32 %v519, %v541
  %543 = vmatmul.f32.gmra.mxu0 %v493
  %v544 = vpop.f32.mrf.mxu0
  %v545 = vadd.f32 %v522, %v544
  %546 = vdwg.mxu0
  %547 = vmatpush.msra.mxu0 %v139
  %548 = vmatpush.msra.mxu0 %v138
  %549 = vmatpush.msra.mxu0 %v137
  %550 = vmatpush.msra.mxu0 %v136
  %551 = vmatpush.msra.mxu0 %v135
  %552 = vmatpush.msra.mxu0 %v134
  %553 = vmatpush.msra.mxu0 %v133
  %554 = vmatpush.msra.mxu0 %v132
  %555 = vmatpush.msra.mxu0 %v131
  %556 = vmatpush.msra.mxu0 %v130
  %557 = vmatpush.msra.mxu0 %v129
  %558 = vmatpush.msra.mxu0 %v128
  %559 = vmatpush.msra.mxu0 %v127
  %560 = vmatpush.msra.mxu0 %v126
  %561 = vmatpush.msra.mxu0 %v125
  %562 = vmatpush.msra.mxu0 %v124
  %563 = vmatmul.f32.gmra.mxu0 %v499
  %v564 = vpop.f32.mrf.mxu0
  %v565 = vadd.f32 0.0, %v564
  %566 = vmatmul.f32.gmra.mxu0 %v500
  %v567 = vpop.f32.mrf.mxu0
  %v568 = vadd.f32 0.0, %v567
  %569 = vdwg.mxu0
  %v570 = vadd.f32 %v542, %v565
  %v571 = vadd.f32 %v545, %v568
  %v572 = vperm.slane %v156, 2
  %v573 = vadd.f32 %v570, %v572
  %v574 = vadd.f32 %v571, %v572
  %v575 = vmax.f32 %v573, 0.0
  %v576 = vmax.f32 %v574, 0.0
  %v577 = vperm.slane %v156, 3
  %578 = vmatpush.msra.mxu0 %v155
  %579 = vmatpush.msra.mxu0 %v154
  %580 = vmatpush.msra.mxu0 %v153
  %581 = vmatpush.msra.mxu0 %v152
  %582 = vmatpush.msra.mxu0 %v151
  %583 = vmatpush.msra.mxu0 %v150
  %584 = vmatpush.msra.mxu0 %v149
  %585 = vmatpush.msra.mxu0 %v148
  %586 = vmatpush.msra.mxu0 %v147
  %587 = vmatpush.msra.mxu0 %v146
  %588 = vmatpush.msra.mxu0 %v145
  %589 = vmatpush.msra.mxu0 %v144
  %590 = vmatpush.msra.mxu0 %v143
  %591 = vmatpush.msra.mxu0 %v142
  %592 = vmatpush.msra.mxu0 %v141
  %593 = vmatpush.msra.mxu0 %v140
  %594 = vmatmul.f32.gmra.mxu0 %v575
  %v595 = vpop.f32.mrf.mxu0
  %v596 = vadd.f32 %v577, %v595
  %597 = vmatmul.f32.gmra.mxu0 %v576
  %v598 = vpop.f32.mrf.mxu0
  %v599 = vadd.f32 %v577, %v598
  %600 = vdwg.mxu0
  %v601 = vadd.f32 %v596, %v485
  %v602 = vadd.f32 %v599, %v486
  %603 = vadd.xlane.f32.xlu0 %v601
  %v604 = vpop.xlane.xlu0 %603
  %605 = vadd.xlane.f32.xlu0 %v602
  %v606 = vpop.xlane.xlu0 %605
  %v607 = vmul.f32 %v604, 0.03125
  %v608 = vmul.f32 %v606, 0.03125
  %v609 = vsub.f32 %v601, %v607
  %v610 = vsub.f32 %v602, %v608
  %v611 = vmul.f32 %v609, %v35
  %v612 = vmul.f32 %v610, %v35
  %v613 = vmul.f32 %v611, %v611
  %v614 = vmul.f32 %v612, %v612
  %615 = vadd.xlane.f32.xlu0 %v613
  %v616 = vpop.xlane.xlu0 %615
  %617 = vadd.xlane.f32.xlu0 %v614
  %v618 = vpop.xlane.xlu0 %617
  %v619 = vmul.f32 %v616, 0.03125
  %v620 = vmul.f32 %v618, 0.03125
  %v621 = vadd.f32 %v619, 1e-05
  %v622 = vadd.f32 %v620, 1e-05
  %v623 = vrsqrt.pop %v621
  %v624 = vmul.f32 %v623, %v621
  %v625 = vmul.f32 %v624, %v623
  %v626 = vmul.f32 0.5, %v625
  %v627 = vsub.f32 1.5, %v626
  %v628 = vmul.f32 %v623, %v627
  %vm629 = vweird.f32 %v621
  %vm630 = vweird.f32 %v623
  %vm631 = vmor %vm629, %vm630
  %v632 = vsel %vm631, %v623, %v628
  %v633 = vrsqrt.pop %v622
  %v634 = vmul.f32 %v633, %v622
  %v635 = vmul.f32 %v634, %v633
  %v636 = vmul.f32 0.5, %v635
  %v637 = vsub.f32 1.5, %v636
  %v638 = vmul.f32 %v633, %v637
  %vm639 = vweird.f32 %v622
  %vm640 = vweird.f32 %v633
  %vm641 = vmor %vm639, %vm640
  %v642 = vsel %vm641, %v633, %v638
  %v643 = vmul.f32 %v611, %v632
  %v644 = vmul.f32 %v612, %v642
  %v645 = vperm.slane %v156, 6
  %v646 = vmul.f32 %v643, %v645
  %v647 = vmul.f32 %v644, %v645
  %v648 = vperm.slane %v156, 7
  %v649 = vadd.f32 %v646, %v648
  %v650 = vadd.f32 %v647, %v648
  %v651 = vmul.f32 %v649, %v21
  %v652 = vmul.f32 %v650, %v26
  %s653 = scalar_lea.vmem %s2, 680
  %v654 = vld [vmem:[%s653] sm:$0xff]
  %v655 = vld [vmem:[%s653 + $0x8] sm:$0xff]
  %v656 = vld [vmem:[%s653 + $0x10] sm:$0xff]
  %v657 = vld [vmem:[%s653 + $0x18] sm:$0xff]
  %v658 = vld [vmem:[%s653 + $0x20] sm:$0xff]
  %v659 = vld [vmem:[%s653 + $0x28] sm:$0xff]
  %v660 = vld [vmem:[%s653 + $0x30] sm:$0xff]
  %v661 = vld [vmem:[%s653 + $0x38] sm:$0xff]
  %v662 = vld [vmem:[%s653 + $0x40] sm:$0xff]
  %v663 = vld [vmem:[%s653 + $0x48] sm:$0xff]
  %v664 = vld [vmem:[%s653 + $0x50] sm:$0xff]
  %v665 = vld [vmem:[%s653 + $0x58] sm:$0xff]
  %v666 = vld [vmem:[%s653 + $0x60] sm:$0xff]
  %v667 = vld [vmem:[%s653 + $0x68] sm:$0xff]
  %v668 = vld [vmem:[%s653 + $0x70] sm:$0xff]
  %v669 = vld [vmem:[%s653 + $0x78] sm:$0xff]
  %v670 = vld [vmem:[%s653 + $0x80] sm:$0xff]
  %v671 = vld [vmem:[%s653 + $0x88] sm:$0xff]
  %v672 = vld [vmem:[%s653 + $0x90] sm:$0xff]
  %v673 = vld [vmem:[%s653 + $0x98] sm:$0xff]
  %v674 = vld [vmem:[%s653 + $0xa0] sm:$0xff]
  %v675 = vld [vmem:[%s653 + $0xa8] sm:$0xff]
  %v676 = vld [vmem:[%s653 + $0xb0] sm:$0xff]
  %v677 = vld [vmem:[%s653 + $0xb8] sm:$0xff]
  %v678 = vld [vmem:[%s653 + $0xc0] sm:$0xff]
  %v679 = vld [vmem:[%s653 + $0xc8] sm:$0xff]
  %v680 = vld [vmem:[%s653 + $0xd0] sm:$0xff]
  %v681 = vld [vmem:[%s653 + $0xd8] sm:$0xff]
  %v682 = vld [vmem:[%s653 + $0xe0] sm:$0xff]
  %v683 = vld [vmem:[%s653 + $0xe8] sm:$0xff]
  %v684 = vld [vmem:[%s653 + $0xf0] sm:$0xff]
  %v685 = vld [vmem:[%s653 + $0xf8] sm:$0xff]
  %v686 = vld [vmem:[%s653 + $0x100] sm:$0xff]
  %v687 = vld [vmem:[%s653 + $0x108] sm:$0xff]
  %v688 = vld [vmem:[%s653 + $0x110] sm:$0xff]
  %v689 = vld [vmem:[%s653 + $0x118] sm:$0xff]
  %v690 = vld [vmem:[%s653 + $0x120] sm:$0xff]
  %v691 = vld [vmem:[%s653 + $0x128] sm:$0xff]
  %v692 = vld [vmem:[%s653 + $0x130] sm:$0xff]
  %v693 = vld [vmem:[%s653 + $0x138] sm:$0xff]
  %v694 = vld [vmem:[%s653 + $0x140] sm:$0xff]
  %v695 = vld [vmem:[%s653 + $0x148] sm:$0xff]
  %v696 = vld [vmem:[%s653 + $0x150] sm:$0xff]
  %v697 = vld [vmem:[%s653 + $0x158] sm:$0xff]
  %v698 = vld [vmem:[%s653 + $0x160] sm:$0xff]
  %v699 = vld [vmem:[%s653 + $0x168] sm:$0xff]
  %v700 = vld [vmem:[%s653 + $0x170] sm:$0xff]
  %v701 = vld [vmem:[%s653 + $0x178] sm:$0xff]
  %v702 = vld [vmem:[%s653 + $0x180] sm:$0xff]
  %v703 = vld [vmem:[%s653 + $0x188] sm:$0xff]
  %v704 = vld [vmem:[%s653 + $0x190] sm:$0xff]
  %v705 = vld [vmem:[%s653 + $0x198] sm:$0xff]
  %v706 = vld [vmem:[%s653 + $0x1a0] sm:$0xff]
  %v707 = vld [vmem:[%s653 + $0x1a8] sm:$0xff]
  %v708 = vld [vmem:[%s653 + $0x1b0] sm:$0xff]
  %v709 = vld [vmem:[%s653 + $0x1b8] sm:$0xff]
  %v710 = vld [vmem:[%s653 + $0x1c0] sm:$0xff]
  %v711 = vld [vmem:[%s653 + $0x1c8] sm:$0xff]
  %v712 = vld [vmem:[%s653 + $0x1d0] sm:$0xff]
  %v713 = vld [vmem:[%s653 + $0x1d8] sm:$0xff]
  %v714 = vld [vmem:[%s653 + $0x1e0] sm:$0xff]
  %v715 = vld [vmem:[%s653 + $0x1e8] sm:$0xff]
  %v716 = vld [vmem:[%s653 + $0x1f0] sm:$0xff]
  %v717 = vld [vmem:[%s653 + $0x1f8] sm:$0xff]
  %v718 = vld [vmem:[%s653 + $0x200] sm:$0xff]
  %v719 = vld [vmem:[%s653 + $0x208] sm:$0xff]
  %v720 = vld [vmem:[%s653 + $0x210] sm:$0xff]
  %v721 = vld [vmem:[%s653 + $0x218] sm:$0xff]
  %v722 = vld [vmem:[%s653 + $0x220] sm:$0xff]
  %v723 = vld [vmem:[%s653 + $0x228] sm:$0xff]
  %v724 = vld [vmem:[%s653 + $0x230] sm:$0xff]
  %v725 = vld [vmem:[%s653 + $0x238] sm:$0xff]
  %v726 = vld [vmem:[%s653 + $0x240] sm:$0xff]
  %v727 = vld [vmem:[%s653 + $0x248] sm:$0xff]
  %v728 = vld [vmem:[%s653 + $0x250] sm:$0xff]
  %v729 = vld [vmem:[%s653 + $0x258] sm:$0xff]
  %v730 = vld [vmem:[%s653 + $0x260] sm:$0xff]
  %v731 = vld [vmem:[%s653 + $0x268] sm:$0xff]
  %v732 = vld [vmem:[%s653 + $0x270] sm:$0xff]
  %v733 = vld [vmem:[%s653 + $0x278] sm:$0xff]
  %v734 = vld [vmem:[%s653 + $0x280] sm:$0xff]
  %v735 = vld [vmem:[%s653 + $0x288] sm:$0xff]
  %v736 = vld [vmem:[%s653 + $0x290] sm:$0xff]
  %v737 = vld [vmem:[%s653 + $0x298] sm:$0xff]
  %v738 = vld [vmem:[%s653 + $0x2a0] sm:$0xff]
  %v739 = vperm.slane %v738, 0
  %740 = vmatpush.msra.mxu0 %v669
  %741 = vmatpush.msra.mxu0 %v668
  %742 = vmatpush.msra.mxu0 %v667
  %743 = vmatpush.msra.mxu0 %v666
  %744 = vmatpush.msra.mxu0 %v665
  %745 = vmatpush.msra.mxu0 %v664
  %746 = vmatpush.msra.mxu0 %v663
  %747 = vmatpush.msra.mxu0 %v662
  %748 = vmatpush.msra.mxu0 %v661
  %749 = vmatpush.msra.mxu0 %v660
  %750 = vmatpush.msra.mxu0 %v659
  %751 = vmatpush.msra.mxu0 %v658
  %752 = vmatpush.msra.mxu0 %v657
  %753 = vmatpush.msra.mxu0 %v656
  %754 = vmatpush.msra.mxu0 %v655
  %755 = vmatpush.msra.mxu0 %v654
  %756 = vmatmul.f32.gmra.mxu0 %v651
  %v757 = vpop.f32.mrf.mxu0
  %v758 = vadd.f32 %v739, %v757
  %759 = vmatmul.f32.gmra.mxu0 %v652
  %v760 = vpop.f32.mrf.mxu0
  %v761 = vadd.f32 %v739, %v760
  %762 = vdwg.mxu0
  %v763 = vperm.slane %v738, 1
  %766 = vrot.lane.b32.xlu0 %v758, 96
  %v767 = vpop.permute.xlu0 %766
  %768 = vrot.lane.b32.xlu0 %v761, 96
  %v769 = vpop.permute.xlu0 %768
  %v770 = vsel %vm188, %v758, 0
  %v772 = vsel %vm188, %v761, 0
  %v774 = vsel %vm188, %v767, 0
  %v776 = vsel %vm188, %v769, 0
  %778 = vmatpush.xpose.msra.mxu0 0.0
  %779 = vmatpush.xpose.msra.mxu0 0.0
  %780 = vmatpush.xpose.msra.mxu0 0.0
  %781 = vmatpush.xpose.msra.mxu0 0.0
  %782 = vmatpush.xpose.msra.mxu0 0.0
  %783 = vmatpush.xpose.msra.mxu0 0.0
  %784 = vmatpush.xpose.msra.mxu0 0.0
  %785 = vmatpush.xpose.msra.mxu0 0.0
  %786 = vmatpush.xpose.msra.mxu0 0.0
  %787 = vmatpush.xpose.msra.mxu0 0.0
  %788 = vmatpush.xpose.msra.mxu0 0.0
  %789 = vmatpush.xpose.msra.mxu0 0.0
  %790 = vmatpush.xpose.msra.mxu0 0.0
  %791 = vmatpush.xpose.msra.mxu0 0.0
  %792 = vmatpush.xpose.msra.mxu0 %v776
  %793 = vmatpush.xpose.msra.mxu0 %v774
  %794 = vmatmul.f32.gmra.mxu0 %v770
  %v795 = vpop.f32.mrf.mxu0
  %v796 = vadd.f32 %v16, %v795
  %797 = vmatmul.f32.gmra.mxu0 %v772
  %v798 = vpop.f32.mrf.mxu0
  %v799 = vadd.f32 %v17, %v798
  %800 = vdwg.mxu0
  %v801 = vsel %vm188, %v796, -inf
  %802 = vmax.xlane.f32.xlu0 %v801
  %v803 = vpop.xlane.xlu0 %802
  %v804 = vsel %vm188, %v799, -inf
  %805 = vmax.xlane.f32.xlu0 %v804
  %v806 = vpop.xlane.xlu0 %805
  %v807 = vsub.f32 %v796, %v803
  %v808 = vsub.f32 %v799, %v806
  %v809 = vmul.f32 %v807, 1.442695
  %v810 = vpow.pop %v809
  %v811 = vmul.f32 %v808, 1.442695
  %v812 = vpow.pop %v811
  %v813 = vsel %vm188, %v810, 0.0
  %814 = vadd.xlane.f32.xlu0 %v813
  %v815 = vpop.xlane.xlu0 %814
  %v816 = vsel %vm188, %v812, 0.0
  %817 = vadd.xlane.f32.xlu0 %v816
  %v818 = vpop.xlane.xlu0 %817
  %v819 = vrcp.pop %v815
  %v820 = vrcp.pop %v818
  %v821 = vmul.f32 %v810, %v819
  %v822 = vmul.f32 %v812, %v820
  %823 = vrot.lane.b32.xlu0 %v758, 64
  %v824 = vpop.permute.xlu0 %823
  %825 = vrot.lane.b32.xlu0 %v761, 64
  %v826 = vpop.permute.xlu0 %825
  %v830 = vsel %vm188, %v821, 0
  %v833 = vsel %vm188, %v822, 0
  %835 = vmatpush.msra.mxu0 0.0
  %836 = vmatpush.msra.mxu0 0.0
  %837 = vmatpush.msra.mxu0 0.0
  %838 = vmatpush.msra.mxu0 0.0
  %839 = vmatpush.msra.mxu0 0.0
  %840 = vmatpush.msra.mxu0 0.0
  %841 = vmatpush.msra.mxu0 0.0
  %842 = vmatpush.msra.mxu0 0.0
  %843 = vmatpush.msra.mxu0 0.0
  %844 = vmatpush.msra.mxu0 0.0
  %845 = vmatpush.msra.mxu0 0.0
  %846 = vmatpush.msra.mxu0 0.0
  %847 = vmatpush.msra.mxu0 0.0
  %848 = vmatpush.msra.mxu0 0.0
  %849 = vmatpush.msra.mxu0 %v826
  %850 = vmatpush.msra.mxu0 %v824
  %851 = vmatmul.f32.gmra.mxu0 %v830
  %v852 = vpop.f32.mrf.mxu0
  %v853 = vadd.f32 0.0, %v852
  %854 = vmatmul.f32.gmra.mxu0 %v833
  %v855 = vpop.f32.mrf.mxu0
  %v856 = vadd.f32 0.0, %v855
  %857 = vdwg.mxu0
  %v859 = vsel %vm188, %v853, 0
  %v862 = vsel %vm188, %v856, 0
  %864 = vmatpush.msra.mxu0 0.0
  %865 = vmatpush.msra.mxu0 0.0
  %866 = vmatpush.msra.mxu0 0.0
  %867 = vmatpush.msra.mxu0 0.0
  %868 = vmatpush.msra.mxu0 0.0
  %869 = vmatpush.msra.mxu0 0.0
  %870 = vmatpush.msra.mxu0 0.0
  %871 = vmatpush.msra.mxu0 0.0
  %872 = vmatpush.msra.mxu0 0.0
  %873 = vmatpush.msra.mxu0 0.0
  %874 = vmatpush.msra.mxu0 0.0
  %875 = vmatpush.msra.mxu0 0.0
  %876 = vmatpush.msra.mxu0 0.0
  %877 = vmatpush.msra.mxu0 0.0
  %878 = vmatpush.msra.mxu0 %v671
  %879 = vmatpush.msra.mxu0 %v670
  %880 = vmatmul.f32.gmra.mxu0 %v859
  %v881 = vpop.f32.mrf.mxu0
  %v882 = vadd.f32 0.0, %v881
  %883 = vmatmul.f32.gmra.mxu0 %v862
  %v884 = vpop.f32.mrf.mxu0
  %v885 = vadd.f32 0.0, %v884
  %886 = vdwg.mxu0
  %v887 = vadd.f32 %v763, %v882
  %v888 = vadd.f32 %v763, %v885
  %889 = vrot.lane.b32.xlu0 %v758, 112
  %v890 = vpop.permute.xlu0 %889
  %891 = vrot.lane.b32.xlu0 %v761, 112
  %v892 = vpop.permute.xlu0 %891
  %893 = vrot.lane.b32.xlu0 %v758, 80
  %v894 = vpop.permute.xlu0 %893
  %895 = vrot.lane.b32.xlu0 %v761, 80
  %v896 = vpop.permute.xlu0 %895
  %v897 = vsel %vm188, %v890, 0
  %v899 = vsel %vm188, %v892, 0
  %v901 = vsel %vm188, %v894, 0
  %v903 = vsel %vm188, %v896, 0
  %905 = vmatpush.xpose.msra.mxu0 0.0
  %906 = vmatpush.xpose.msra.mxu0 0.0
  %907 = vmatpush.xpose.msra.mxu0 0.0
  %908 = vmatpush.xpose.msra.mxu0 0.0
  %909 = vmatpush.xpose.msra.mxu0 0.0
  %910 = vmatpush.xpose.msra.mxu0 0.0
  %911 = vmatpush.xpose.msra.mxu0 0.0
  %912 = vmatpush.xpose.msra.mxu0 0.0
  %913 = vmatpush.xpose.msra.mxu0 0.0
  %914 = vmatpush.xpose.msra.mxu0 0.0
  %915 = vmatpush.xpose.msra.mxu0 0.0
  %916 = vmatpush.xpose.msra.mxu0 0.0
  %917 = vmatpush.xpose.msra.mxu0 0.0
  %918 = vmatpush.xpose.msra.mxu0 0.0
  %919 = vmatpush.xpose.msra.mxu0 %v903
  %920 = vmatpush.xpose.msra.mxu0 %v901
  %921 = vmatmul.f32.gmra.mxu0 %v897
  %v922 = vpop.f32.mrf.mxu0
  %v923 = vadd.f32 %v16, %v922
  %924 = vmatmul.f32.gmra.mxu0 %v899
  %v925 = vpop.f32.mrf.mxu0
  %v926 = vadd.f32 %v17, %v925
  %927 = vdwg.mxu0
  %v928 = vsel %vm188, %v923, -inf
  %929 = vmax.xlane.f32.xlu0 %v928
  %v930 = vpop.xlane.xlu0 %929
  %v931 = vsel %vm188, %v926, -inf
  %932 = vmax.xlane.f32.xlu0 %v931
  %v933 = vpop.xlane.xlu0 %932
  %v934 = vsub.f32 %v923, %v930
  %v935 = vsub.f32 %v926, %v933
  %v936 = vmul.f32 %v934, 1.442695
  %v937 = vpow.pop %v936
  %v938 = vmul.f32 %v935, 1.442695
  %v939 = vpow.pop %v938
  %v940 = vsel %vm188, %v937, 0.0
  %941 = vadd.xlane.f32.xlu0 %v940
  %v942 = vpop.xlane.xlu0 %941
  %v943 = vsel %vm188, %v939, 0.0
  %944 = vadd.xlane.f32.xlu0 %v943
  %v945 = vpop.xlane.xlu0 %944
  %v946 = vrcp.pop %v942
  %v947 = vrcp.pop %v945
  %v948 = vmul.f32 %v937, %v946
  %v949 = vmul.f32 %v939, %v947
  %950 = vrot.lane.b32.xlu0 %v758, 48
  %v951 = vpop.permute.xlu0 %950
  %952 = vrot.lane.b32.xlu0 %v761, 48
  %v953 = vpop.permute.xlu0 %952
  %v957 = vsel %vm188, %v948, 0
  %v960 = vsel %vm188, %v949, 0
  %962 = vmatpush.msra.mxu0 0.0
  %963 = vmatpush.msra.mxu0 0.0
  %964 = vmatpush.msra.mxu0 0.0
  %965 = vmatpush.msra.mxu0 0.0
  %966 = vmatpush.msra.mxu0 0.0
  %967 = vmatpush.msra.mxu0 0.0
  %968 = vmatpush.msra.mxu0 0.0
  %969 = vmatpush.msra.mxu0 0.0
  %970 = vmatpush.msra.mxu0 0.0
  %971 = vmatpush.msra.mxu0 0.0
  %972 = vmatpush.msra.mxu0 0.0
  %973 = vmatpush.msra.mxu0 0.0
  %974 = vmatpush.msra.mxu0 0.0
  %975 = vmatpush.msra.mxu0 0.0
  %976 = vmatpush.msra.mxu0 %v953
  %977 = vmatpush.msra.mxu0 %v951
  %978 = vmatmul.f32.gmra.mxu0 %v957
  %v979 = vpop.f32.mrf.mxu0
  %v980 = vadd.f32 0.0, %v979
  %981 = vmatmul.f32.gmra.mxu0 %v960
  %v982 = vpop.f32.mrf.mxu0
  %v983 = vadd.f32 0.0, %v982
  %984 = vdwg.mxu0
  %v986 = vsel %vm188, %v980, 0
  %v989 = vsel %vm188, %v983, 0
  %991 = vmatpush.msra.mxu0 0.0
  %992 = vmatpush.msra.mxu0 0.0
  %993 = vmatpush.msra.mxu0 0.0
  %994 = vmatpush.msra.mxu0 0.0
  %995 = vmatpush.msra.mxu0 0.0
  %996 = vmatpush.msra.mxu0 0.0
  %997 = vmatpush.msra.mxu0 0.0
  %998 = vmatpush.msra.mxu0 0.0
  %999 = vmatpush.msra.mxu0 0.0
  %1000 = vmatpush.msra.mxu0 0.0
  %1001 = vmatpush.msra.mxu0 0.0
  %1002 = vmatpush.msra.mxu0 0.0
  %1003 = vmatpush.msra.mxu0 0.0
  %1004 = vmatpush.msra.mxu0 0.0
  %1005 = vmatpush.msra.mxu0 %v673
  %1006 = vmatpush.msra.mxu0 %v672
  %1007 = vmatmul.f32.gmra.mxu0 %v986
  %v1008 = vpop.f32.mrf.mxu0
  %v1009 = vadd.f32 0.0, %v1008
  %1010 = vmatmul.f32.gmra.mxu0 %v989
  %v1011 = vpop.f32.mrf.mxu0
  %v1012 = vadd.f32 0.0, %v1011
  %1013 = vdwg.mxu0
  %v1014 = vadd.f32 %v887, %v1009
  %v1015 = vadd.f32 %v888, %v1012
  %v1016 = vadd.f32 %v1014, %v651
  %v1017 = vadd.f32 %v1015, %v652
  %1018 = vadd.xlane.f32.xlu0 %v1016
  %v1019 = vpop.xlane.xlu0 %1018
  %1020 = vadd.xlane.f32.xlu0 %v1017
  %v1021 = vpop.xlane.xlu0 %1020
  %v1022 = vmul.f32 %v1019, 0.03125
  %v1023 = vmul.f32 %v1021, 0.03125
  %v1024 = vsub.f32 %v1016, %v1022
  %v1025 = vsub.f32 %v1017, %v1023
  %v1026 = vmul.f32 %v1024, %v35
  %v1027 = vmul.f32 %v1025, %v35
  %v1028 = vmul.f32 %v1026, %v1026
  %v1029 = vmul.f32 %v1027, %v1027
  %1030 = vadd.xlane.f32.xlu0 %v1028
  %v1031 = vpop.xlane.xlu0 %1030
  %1032 = vadd.xlane.f32.xlu0 %v1029
  %v1033 = vpop.xlane.xlu0 %1032
  %v1034 = vmul.f32 %v1031, 0.03125
  %v1035 = vmul.f32 %v1033, 0.03125
  %v1036 = vadd.f32 %v1034, 1e-05
  %v1037 = vadd.f32 %v1035, 1e-05
  %v1038 = vrsqrt.pop %v1036
  %v1039 = vmul.f32 %v1038, %v1036
  %v1040 = vmul.f32 %v1039, %v1038
  %v1041 = vmul.f32 0.5, %v1040
  %v1042 = vsub.f32 1.5, %v1041
  %v1043 = vmul.f32 %v1038, %v1042
  %vm1044 = vweird.f32 %v1036
  %vm1045 = vweird.f32 %v1038
  %vm1046 = vmor %vm1044, %vm1045
  %v1047 = vsel %vm1046, %v1038, %v1043
  %v1048 = vrsqrt.pop %v1037
  %v1049 = vmul.f32 %v1048, %v1037
  %v1050 = vmul.f32 %v1049, %v1048
  %v1051 = vmul.f32 0.5, %v1050
  %v1052 = vsub.f32 1.5, %v1051
  %v1053 = vmul.f32 %v1048, %v1052
  %vm1054 = vweird.f32 %v1037
  %vm1055 = vweird.f32 %v1048
  %vm1056 = vmor %vm1054, %vm1055
  %v1057 = vsel %vm1056, %v1048, %v1053
  %v1058 = vmul.f32 %v1026, %v1047
  %v1059 = vmul.f32 %v1027, %v1057
  %v1060 = vperm.slane %v738, 4
  %v1061 = vmul.f32 %v1058, %v1060
  %v1062 = vmul.f32 %v1059, %v1060
  %v1063 = vperm.slane %v738, 5
  %v1064 = vadd.f32 %v1061, %v1063
  %v1065 = vadd.f32 %v1062, %v1063
  %v1066 = vmul.f32 %v1064, %v21
  %v1067 = vmul.f32 %v1065, %v26
  %v1068 = vrot.slane %v1066, 7
  %v1069 = vrot.slane %v1067, 7
  %v1070 = vsel %vm489, %v1068, %v1069
  %v1071 = vsel %vm489, %v1069, %v1068
  %v1072 = vmul.f32 %v1071, %v64
  %v1073 = vmul.f32 %v1070, %v65
  %v1074 = vrot.slane %v1066, 1
  %v1075 = vrot.slane %v1067, 1
  %v1076 = vsel %vm496, %v1074, %v1075
  %v1077 = vsel %vm496, %v1075, %v1074
  %v1078 = vmul.f32 %v1076, %v70
  %v1079 = vmul.f32 %v1077, %v71
  %1080 = vmatpush.msra.mxu0 %v705
  %1081 = vmatpush.msra.mxu0 %v704
  %1082 = vmatpush.msra.mxu0 %v703
  %1083 = vmatpush.msra.mxu0 %v702
  %1084 = vmatpush.msra.mxu0 %v701
  %1085 = vmatpush.msra.mxu0 %v700
  %1086 = vmatpush.msra.mxu0 %v699
  %1087 = vmatpush.msra.mxu0 %v698
  %1088 = vmatpush.msra.mxu0 %v697
  %1089 = vmatpush.msra.mxu0 %v696
  %1090 = vmatpush.msra.mxu0 %v695
  %1091 = vmatpush.msra.mxu0 %v694
  %1092 = vmatpush.msra.mxu0 %v693
  %1093 = vmatpush.msra.mxu0 %v692
  %1094 = vmatpush.msra.mxu0 %v691
  %1095 = vmatpush.msra.mxu0 %v690
  %1096 = vmatmul.f32.gmra.mxu0 %v1066
  %v1097 = vpop.f32.mrf.mxu0
  %v1098 = vadd.f32 0.0, %v1097
  %1099 = vmatmul.f32.gmra.mxu0 %v1067
  %v1100 = vpop.f32.mrf.mxu0
  %v1101 = vadd.f32 0.0, %v1100
  %1102 = vdwg.mxu0
  %1103 = vmatpush.msra.mxu0 %v689
  %1104 = vmatpush.msra.mxu0 %v688
  %1105 = vmatpush.msra.mxu0 %v687
  %1106 = vmatpush.msra.mxu0 %v686
  %1107 = vmatpush.msra.mxu0 %v685
  %1108 = vmatpush.msra.mxu0 %v684
  %1109 = vmatpush.msra.mxu0 %v683
  %1110 = vmatpush.msra.mxu0 %v682
  %1111 = vmatpush.msra.mxu0 %v681
  %1112 = vmatpush.msra.mxu0 %v680
  %1113 = vmatpush.msra.mxu0 %v679
  %1114 = vmatpush.msra.mxu0 %v678
  %1115 = vmatpush.msra.mxu0 %v677
  %1116 = vmatpush.msra.mxu0 %v676
  %1117 = vmatpush.msra.mxu0 %v675
  %1118 = vmatpush.msra.mxu0 %v674
  %1119 = vmatmul.f32.gmra.mxu0 %v1072
  %v1120 = vpop.f32.mrf.mxu0
  %v1121 = vadd.f32 %v1098, %v1120
  %1122 = vmatmul.f32.gmra.mxu0 %v1073
  %v1123 = vpop.f32.mrf.mxu0
  %v1124 = vadd.f32 %v1101, %v1123
  %1125 = vdwg.mxu0
  %1126 = vmatpush.msra.mxu0 %v721
  %1127 = vmatpush.msra.mxu0 %v720
  %1128 = vmatpush.msra.mxu0 %v719
  %1129 = vmatpush.msra.mxu0 %v718
  %1130 = vmatpush.msra.mxu0 %v717
  %1131 = vmatpush.msra.mxu0 %v716
  %1132 = vmatpush.msra.mxu0 %v715
  %1133 = vmatpush.msra.mxu0 %v714
  %1134 = vmatpush.msra.mxu0 %v713
  %1135 = vmatpush.msra.mxu0 %v712
  %1136 = vmatpush.msra.mxu0 %v711
  %1137 = vmatpush.msra.mxu0 %v710
  %1138 = vmatpush.msra.mxu0 %v709
  %1139 = vmatpush.msra.mxu0 %v708
  %1140 = vmatpush.msra.mxu0 %v707
  %1141 = vmatpush.msra.mxu0 %v706
  %1142 = vmatmul.f32.gmra.mxu0 %v1078
  %v1143 = vpop.f32.mrf.mxu0
  %v1144 = vadd.f32 0.0, %v1143
  %1145 = vmatmul.f32.gmra.mxu0 %v1079
  %v1146 = vpop.f32.mrf.mxu0
  %v1147 = vadd.f32 0.0, %v1146
  %1148 = vdwg.mxu0
  %v1149 = vadd.f32 %v1121, %v1144
  %v1150 = vadd.f32 %v1124, %v1147
  %v1151 = vperm.slane %v738, 2
  %v1152 = vadd.f32 %v1149, %v1151
  %v1153 = vadd.f32 %v1150, %v1151
  %v1154 = vmax.f32 %v1152, 0.0
  %v1155 = vmax.f32 %v1153, 0.0
  %v1156 = vperm.slane %v738, 3
  %1157 = vmatpush.msra.mxu0 %v737
  %1158 = vmatpush.msra.mxu0 %v736
  %1159 = vmatpush.msra.mxu0 %v735
  %1160 = vmatpush.msra.mxu0 %v734
  %1161 = vmatpush.msra.mxu0 %v733
  %1162 = vmatpush.msra.mxu0 %v732
  %1163 = vmatpush.msra.mxu0 %v731
  %1164 = vmatpush.msra.mxu0 %v730
  %1165 = vmatpush.msra.mxu0 %v729
  %1166 = vmatpush.msra.mxu0 %v728
  %1167 = vmatpush.msra.mxu0 %v727
  %1168 = vmatpush.msra.mxu0 %v726
  %1169 = vmatpush.msra.mxu0 %v725
  %1170 = vmatpush.msra.mxu0 %v724
  %1171 = vmatpush.msra.mxu0 %v723
  %1172 = vmatpush.msra.mxu0 %v722
  %1173 = vmatmul.f32.gmra.mxu0 %v1154
  %v1174 = vpop.f32.mrf.mxu0
  %v1175 = vadd.f32 %v1156, %v1174
  %1176 = vmatmul.f32.gmra.mxu0 %v1155
  %v1177 = vpop.f32.mrf.mxu0
  %v1178 = vadd.f32 %v1156, %v1177
  %1179 = vdwg.mxu0
  %v1180 = vadd.f32 %v1175, %v1066
  %v1181 = vadd.f32 %v1178, %v1067
  %1182 = vadd.xlane.f32.xlu0 %v1180
  %v1183 = vpop.xlane.xlu0 %1182
  %1184 = vadd.xlane.f32.xlu0 %v1181
  %v1185 = vpop.xlane.xlu0 %1184
  %v1186 = vmul.f32 %v1183, 0.03125
  %v1187 = vmul.f32 %v1185, 0.03125
  %v1188 = vsub.f32 %v1180, %v1186
  %v1189 = vsub.f32 %v1181, %v1187
  %v1190 = vmul.f32 %v1188, %v35
  %v1191 = vmul.f32 %v1189, %v35
  %v1192 = vmul.f32 %v1190, %v1190
  %v1193 = vmul.f32 %v1191, %v1191
  %1194 = vadd.xlane.f32.xlu0 %v1192
  %v1195 = vpop.xlane.xlu0 %1194
  %1196 = vadd.xlane.f32.xlu0 %v1193
  %v1197 = vpop.xlane.xlu0 %1196
  %v1198 = vmul.f32 %v1195, 0.03125
  %v1199 = vmul.f32 %v1197, 0.03125
  %v1200 = vadd.f32 %v1198, 1e-05
  %v1201 = vadd.f32 %v1199, 1e-05
  %v1202 = vrsqrt.pop %v1200
  %v1203 = vmul.f32 %v1202, %v1200
  %v1204 = vmul.f32 %v1203, %v1202
  %v1205 = vmul.f32 0.5, %v1204
  %v1206 = vsub.f32 1.5, %v1205
  %v1207 = vmul.f32 %v1202, %v1206
  %vm1208 = vweird.f32 %v1200
  %vm1209 = vweird.f32 %v1202
  %vm1210 = vmor %vm1208, %vm1209
  %v1211 = vsel %vm1210, %v1202, %v1207
  %v1212 = vrsqrt.pop %v1201
  %v1213 = vmul.f32 %v1212, %v1201
  %v1214 = vmul.f32 %v1213, %v1212
  %v1215 = vmul.f32 0.5, %v1214
  %v1216 = vsub.f32 1.5, %v1215
  %v1217 = vmul.f32 %v1212, %v1216
  %vm1218 = vweird.f32 %v1201
  %vm1219 = vweird.f32 %v1212
  %vm1220 = vmor %vm1218, %vm1219
  %v1221 = vsel %vm1220, %v1212, %v1217
  %v1222 = vmul.f32 %v1190, %v1211
  %v1223 = vmul.f32 %v1191, %v1221
  %v1224 = vperm.slane %v738, 6
  %v1225 = vmul.f32 %v1222, %v1224
  %v1226 = vmul.f32 %v1223, %v1224
  %v1227 = vperm.slane %v738, 7
  %v1228 = vadd.f32 %v1225, %v1227
  %v1229 = vadd.f32 %v1226, %v1227
  %v1230 = vmul.f32 %v1228, %v21
  %v1231 = vmul.f32 %v1229, %v26
  %1232 = vst [vmem:[%s3] sm:$0xff] %v1230
  %1233 = vst [vmem:[%s3 + $0x8] sm:$0xff] %v1231
  // Predicated region
  $region14: #{encoder_forward.1} parent=0 // pred_check
    _
  $region15: #{encoder_forward.1} parent=0 // pred_check_branch
    %1235 = sbr.rel (0) target = $region17
  $region16: #{encoder_forward.1} parent=0 // pred_region
    _
  $region17: #{encoder_forward.1} parent=0 // pred_fallthru
    _
  // Predicated region
  $region18: #{encoder_forward.1} parent=0 // pred_check
    _
  $region19: #{encoder_forward.1} parent=0 // pred_check_branch
    %1237 = sbr.rel (0) target = $region21
  $region20: #{encoder_forward.1} parent=0 // pred_region
    _
  $region21: #{encoder_forward.1} parent=0 // pred_fallthru
    _

</llo_original>
